<compile_context>
chip_gen: v7x
topology: tpu7x:2x2x1
jax: 0.10.0
libtpu: 0.0.40
codegen_flags: <defaults>
</compile_context>

<pallas_src>
import functools
import jax
import jax.numpy as jnp
from jax.experimental import pallas as pl
from jax.experimental.pallas import tpu as pltpu

_SUBLANE = 8
_BF16 = jnp.bfloat16


def _vmem_spec():
    return pl.BlockSpec(memory_space=pltpu.MemorySpace.VMEM)


def _layernorm(x, gamma, beta, eps=1e-5):
    mu = jnp.mean(x, axis=-1, keepdims=True)
    var = jnp.mean(jnp.square(x - mu), axis=-1, keepdims=True)
    return (x - mu) * jax.lax.rsqrt(var + eps) * gamma + beta


# ----------------------- fused 2-layer LSTM (whole sequence, one call) -----------------------
def _lstm2_kernel(x_ref, wih1_ref, whh1_ref, b1_ref, w2_ref, b2_ref, o_ref):
    T, B, D = x_ref.shape
    H = whh1_ref.shape[0]
    G = 4 * H

    # Hoisted: layer-1 input contribution for all timesteps in one MXU matmul
    # (bf16 operands, f32 accumulate).  Kept as a traced value; per-step slices below
    # are static, so there is no scratch store/reload on the latency-bound recurrence.
    x2 = x_ref[...].reshape(T * B, D).astype(_BF16)
    gx = jnp.dot(x2, wih1_ref[...], preferred_element_type=jnp.float32) + b1_ref[...]

    # Hoisted loop-invariant loads / broadcasts.
    whh1 = whh1_ref[...]                                  # (H, 4H)  bf16
    w2 = w2_ref[...]                                      # (2H, 4H) bf16, [wih2; whh2] stacked
    b2 = jnp.broadcast_to(b2_ref[...], (B, G))            # hoisted broadcast (no per-iter bcast)

    def gates_to_hc(g, c_prev):
        # PyTorch gate order: i, f, g, o.  Two full-width EUP pushes (sigmoid + tanh
        # over the whole (B, 4H) vector) instead of four partial-vreg ones.
        sig = jax.nn.sigmoid(g)
        tg = jnp.tanh(g)
        i = sig[:, 0:H]
        f = sig[:, H:2 * H]
        gg = tg[:, 2 * H:3 * H]
        o = sig[:, 3 * H:G]
        c = f * c_prev + i * gg
        h = o * jnp.tanh(c)
        return h, c

    zeros = jnp.zeros((B, H), jnp.float32)
    h1, c1, h2, c2 = zeros, zeros, zeros, zeros

    # Full static unroll: T is a compile-time constant, every gx slice and o_ref
    # store uses a static index, and the two per-step matmuls can overlap with the
    # gate nonlinearities across iterations.
    for t in range(T):
        g1 = gx[t * B:(t + 1) * B, :] + jnp.dot(
            h1.astype(_BF16), whh1, preferred_element_type=jnp.float32)
        h1, c1 = gates_to_hc(g1, c1)
        # inter-layer dropout is train-only => identity
        hcat = jnp.concatenate([h1, h2], axis=-1).astype(_BF16)           # (B, 2H)
        g2 = jnp.dot(hcat, w2, preferred_element_type=jnp.float32) + b2   # fused l2 matmul
        h2, c2 = gates_to_hc(g2, c2)
        o_ref[t] = h2


def lstm2(x_tbd, p):
    T, Bp, _ = x_tbd.shape
    H = p['l1_whh_t'].shape[0]
    wih1 = p['l1_wih_t'].astype(_BF16)
    whh1 = p['l1_whh_t'].astype(_BF16)
    # layer-2 input + recurrent weights stacked once outside the kernel -> one dot per step
    w2 = jnp.concatenate([p['l2_wih_t'], p['l2_whh_t']], axis=0).astype(_BF16)  # (2H, 4H)
    return pl.pallas_call(
        _lstm2_kernel,
        out_shape=jax.ShapeDtypeStruct((T, Bp, H), jnp.float32),
        in_specs=[_vmem_spec()] * 6,
        out_specs=_vmem_spec(),
        compiler_params=pltpu.CompilerParams(vmem_limit_bytes=32 * 1024 * 1024),
    )(x_tbd, wih1, whh1, p['l1_b'], w2, p['l2_b'])


# --------------- fused post-LSTM head: norm1 + cross-attn + norm2 + fc1/fc2/fc3 ---------------
def _head_kernel(seq_ref, x_ref,
                 ln1g_ref, ln1b_ref,
                 wkv_ref, bkv_ref,
                 wq_ref, bq_ref, wk_ref, bk_ref, wv_ref, bv_ref,
                 wo_ref, bo_ref,
                 ln2g_ref, ln2b_ref,
                 w1_ref, b1_ref, w2_ref, b2_ref, w3_ref, b3_ref,
                 out_ref, *, num_heads):
    # One grid program per batch element:  seq_ref (1, T, H), x_ref (1, T, D).
    _, T, H = seq_ref.shape
    DH = H // num_heads

    # norm1(lstm_out) -> query.  This is also the residual feeding norm2, matching the
    # PyTorch reassignment `seq_out = self.norm1(seq_out)` before `attn_out + seq_out`.
    seq = seq_ref[0]                                                    # (T, H) f32
    q_in = _layernorm(seq, ln1g_ref[...], ln1b_ref[...])

    # fused key/value projections from the raw input (one (D, 2H) matmul)
    x2 = x_ref[0].astype(_BF16)                                         # (T, D)
    kv = jnp.dot(x2, wkv_ref[...], preferred_element_type=jnp.float32) + bkv_ref[...]
    k_in = kv[:, :H]
    v_in = kv[:, H:]

    # attention in-projections (bf16 operands, f32 accumulate)
    q = jnp.dot(q_in.astype(_BF16), wq_ref[...], preferred_element_type=jnp.float32) + bq_ref[...]
    k = jnp.dot(k_in.astype(_BF16), wk_ref[...], preferred_element_type=jnp.float32) + bk_ref[...]
    v = jnp.dot(v_in.astype(_BF16), wv_ref[...], preferred_element_type=jnp.float32) + bv_ref[...]

    # Heads as a leading batch axis via static lane slices.  Batch separation comes
    # from the grid, so there is no (row % B) mask and scores are only (NH, T, T).
    def split_heads(z):
        return jnp.stack([z[:, h * DH:(h + 1) * DH] for h in range(num_heads)], axis=0)

    qh = split_heads(q).astype(_BF16)                                   # (NH, T, DH)
    kh = split_heads(k).astype(_BF16)
    vh = split_heads(v).astype(_BF16)

    scale = 1.0 / float(DH) ** 0.5
    s = jnp.einsum('hqd,hkd->hqk', qh, kh, preferred_element_type=jnp.float32) * scale
    s = s - jnp.max(s, axis=-1, keepdims=True)
    pr = jnp.exp(s)
    pr = pr / jnp.sum(pr, axis=-1, keepdims=True)                       # exact softmax (f32)
    oh = jnp.einsum('hqk,hkd->hqd', pr.astype(_BF16), vh, preferred_element_type=jnp.float32)
    attn = jnp.concatenate([oh[h] for h in range(num_heads)], axis=-1)  # (T, H)

    # out-proj, residual with the norm1 output, norm2
    attn = jnp.dot(attn.astype(_BF16), wo_ref[...], preferred_element_type=jnp.float32) + bo_ref[...]
    y = _layernorm(attn + q_in, ln2g_ref[...], ln2b_ref[...])

    # dropout => identity; fc1/fc2/relu are per-row so the last-timestep slice commutes
    # with them -- slice first and run the fc head on a single row.
    y_last = y[T - 1:T, :]                                              # (1, H)
    f1 = jnp.maximum(
        jnp.dot(y_last.astype(_BF16), w1_ref[...], preferred_element_type=jnp.float32)
        + b1_ref[...], 0.0)
    f2 = jnp.maximum(
        jnp.dot(f1.astype(_BF16), w2_ref[...], preferred_element_type=jnp.float32)
        + b2_ref[...], 0.0)
    out_ref[0] = jnp.dot(f2.astype(_BF16), w3_ref[...], preferred_element_type=jnp.float32) + b3_ref[...]


def fused_head(seq_bth, x_btd, p, num_heads):
    B, T, H = seq_bth.shape
    D = x_btd.shape[-1]
    pred_len = p['fc3_w_t'].shape[1]

    weights = [
        p['ln1_g'], p['ln1_b'],
        p['kvproj_w_t'].astype(_BF16), p['kvproj_b'],
        p['wq_t'].astype(_BF16), p['bq'],
        p['wk_t'].astype(_BF16), p['bk'],
        p['wv_t'].astype(_BF16), p['bv'],
        p['wo_t'].astype(_BF16), p['bo'],
        p['ln2_g'], p['ln2_b'],
        p['fc1_w_t'].astype(_BF16), p['fc1_b'],
        p['fc2_w_t'].astype(_BF16), p['fc2_b'],
        p['fc3_w_t'].astype(_BF16), p['fc3_b'],
    ]

    def _rep_spec(a):
        n = a.ndim
        shape = tuple(a.shape)
        return pl.BlockSpec(shape, lambda b: (0,) * n)   # grid-invariant full-array block

    kern = functools.partial(_head_kernel, num_heads=num_heads)
    out = pl.pallas_call(
        kern,
        grid=(B,),
        out_shape=jax.ShapeDtypeStruct((B, 1, pred_len), jnp.float32),
        in_specs=[pl.BlockSpec((1, T, H), lambda b: (b, 0, 0)),
                  pl.BlockSpec((1, T, D), lambda b: (b, 0, 0))]
                 + [_rep_spec(a) for a in weights],
        out_specs=pl.BlockSpec((1, 1, pred_len), lambda b: (b, 0, 0)),
        compiler_params=pltpu.CompilerParams(
            dimension_semantics=("parallel",),            # batch programs are independent (v7x 2 TCs)
            vmem_limit_bytes=32 * 1024 * 1024),
        # TODO(synk): at scaled (B, T) additionally tile over query rows / heads so the
        # per-program (NH, T, T) score tile and resident fc weights stay under VMEM budget.
    )(seq_bth, x_btd, *weights)
    return out.reshape(B, pred_len)


# ------------------------------------ Parameters ---------------------------------------
def init_params(key, input_dim, hidden_dim, pred_len):
    keys = iter(jax.random.split(key, 64))

    def w(shape, scale=0.1):
        return jax.random.normal(next(keys), shape, jnp.float32) * scale

    H = hidden_dim
    p = {}
    # 2-layer LSTM: weight_ih (4H, Din)^T, weight_hh (4H, H)^T, combined bias (b_ih + b_hh)
    p['l1_wih_t'] = w((input_dim, 4 * H)); p['l1_whh_t'] = w((H, 4 * H)); p['l1_b'] = w((1, 4 * H))
    p['l2_wih_t'] = w((H, 4 * H));         p['l2_whh_t'] = w((H, 4 * H)); p['l2_b'] = w((1, 4 * H))
    # LayerNorms
    p['ln1_g'] = jnp.ones((1, H), jnp.float32); p['ln1_b'] = jnp.zeros((1, H), jnp.float32)
    p['ln2_g'] = jnp.ones((1, H), jnp.float32); p['ln2_b'] = jnp.zeros((1, H), jnp.float32)
    # key / value projections from raw input, fused into one (Din, 2H) weight
    p['kvproj_w_t'] = w((input_dim, 2 * H)); p['kvproj_b'] = w((1, 2 * H))
    # nn.MultiheadAttention in_proj (split into q/k/v) and out_proj
    p['wq_t'] = w((H, H)); p['bq'] = w((1, H))
    p['wk_t'] = w((H, H)); p['bk'] = w((1, H))
    p['wv_t'] = w((H, H)); p['bv'] = w((1, H))
    p['wo_t'] = w((H, H)); p['bo'] = w((1, H))
    # fc head (module hard-codes 512 / 256)
    p['fc1_w_t'] = w((H, 512));   p['fc1_b'] = w((1, 512))
    p['fc2_w_t'] = w((512, 256)); p['fc2_b'] = w((1, 256))
    p['fc3_w_t'] = w((256, pred_len)); p['fc3_b'] = w((1, pred_len))
    return p


# -------------------------------------- Forward ----------------------------------------
def forward(p, x, hidden_dim, num_heads):
    assert hidden_dim % num_heads == 0
    B, T, _ = x.shape
    # Pad batch up to a sublane multiple so the recurrent (B, 4H) vregs / per-step
    # stores in the LSTM are dense (compute-free: same vreg count).
    Bp = ((B + _SUBLANE - 1) // _SUBLANE) * _SUBLANE
    x_pad = jnp.pad(x, ((0, Bp - B), (0, 0), (0, 0)))
    x_tbd = jnp.transpose(x_pad, (1, 0, 2))          # (T, Bp, D) time-major for the recurrence
    seq = lstm2(x_tbd, p)                            # (T, Bp, H) fused 2-layer LSTM
    seq_bth = jnp.transpose(seq, (1, 0, 2))[:B]      # (B, T, H) batch-major, padding dropped
    return fused_head(seq_bth, x, p, num_heads)      # (B, pred_len)


if __name__ == "__main__":
    # Small shapes consistent with the module: batch=2, seq=8, input_dim=4,
    # hidden_dim=32 (8 heads -> head_dim=4), pred_len=16.
    B, T, INPUT_DIM = 2, 8, 4
    HIDDEN_DIM, NUM_HEADS, PRED_LEN = 32, 8, 16

    root = jax.random.PRNGKey(0)
    k_params, k_x = jax.random.split(root)
    params = init_params(k_params, INPUT_DIM, HIDDEN_DIM, PRED_LEN)
    x = jax.random.normal(k_x, (B, T, INPUT_DIM), jnp.float32)

    out = forward(params, x, HIDDEN_DIM, NUM_HEADS)
    out = jax.block_until_ready(out)
    assert out.shape == (B, PRED_LEN) and out.dtype == jnp.float32
    print("KERNEL_OK")
</pallas_src>

<mosaic_0001>
module attributes {stable_mosaic.version = 11 : i64} {
  func.func @_lstm2_kernel(%arg0: memref<8x8x4xf32, #tpu.memory_space<vmem>>, %arg1: memref<4x128xbf16, #tpu.memory_space<vmem>>, %arg2: memref<32x128xbf16, #tpu.memory_space<vmem>>, %arg3: memref<1x128xf32, #tpu.memory_space<vmem>>, %arg4: memref<64x128xbf16, #tpu.memory_space<vmem>>, %arg5: memref<1x128xf32, #tpu.memory_space<vmem>>, %arg6: memref<8x8x32xf32, #tpu.memory_space<vmem>>) attributes {dimension_semantics = [], scalar_prefetch = 0 : i64, scratch_operands = 0 : i64, tpu.core_type = #tpu.core_type<tc>} {
    %c0 = arith.constant 0 : index
    %c0_0 = arith.constant 0 : index
    %c0_1 = arith.constant 0 : index
    %0 = vector.load %arg0[%c0, %c0_0, %c0_1] : memref<8x8x4xf32, #tpu.memory_space<vmem>>, vector<8x8x4xf32>
    %1 = vector.shape_cast %0 : vector<8x8x4xf32> to vector<64x4xf32>
    %2 = arith.truncf %1 : vector<64x4xf32> to vector<64x4xbf16>
    %c0_2 = arith.constant 0 : index
    %c0_3 = arith.constant 0 : index
    %3 = vector.load %arg1[%c0_2, %c0_3] : memref<4x128xbf16, #tpu.memory_space<vmem>>, vector<4x128xbf16>
    %cst = arith.constant dense<0.000000e+00> : vector<64x128xf32>
    %4 = tpu.matmul %2, %3, %cst {dimension_numbers = #tpu.dot_dimension_numbers<[1], [0], [0], [1], [0, 0, 1, 1], [], []>} : vector<64x4xbf16>, vector<4x128xbf16>, vector<64x128xf32> -> vector<64x128xf32>
    %c0_4 = arith.constant 0 : index
    %c0_5 = arith.constant 0 : index
    %5 = vector.load %arg3[%c0_4, %c0_5] : memref<1x128xf32, #tpu.memory_space<vmem>>, vector<1x128xf32>
    %6 = vector.broadcast %5 : vector<1x128xf32> to vector<64x128xf32>
    %7 = arith.addf %4, %6 : vector<64x128xf32>
    %c0_6 = arith.constant 0 : index
    %c0_7 = arith.constant 0 : index
    %8 = vector.load %arg2[%c0_6, %c0_7] : memref<32x128xbf16, #tpu.memory_space<vmem>>, vector<32x128xbf16>
    %c0_8 = arith.constant 0 : index
    %c0_9 = arith.constant 0 : index
    %9 = vector.load %arg4[%c0_8, %c0_9] : memref<64x128xbf16, #tpu.memory_space<vmem>>, vector<64x128xbf16>
    %c0_10 = arith.constant 0 : index
    %c0_11 = arith.constant 0 : index
    %10 = vector.load %arg5[%c0_10, %c0_11] : memref<1x128xf32, #tpu.memory_space<vmem>>, vector<1x128xf32>
    %11 = vector.shape_cast %10 : vector<1x128xf32> to vector<1x128xf32>
    %12 = vector.broadcast %11 : vector<1x128xf32> to vector<8x128xf32>
    %cst_12 = arith.constant 0.000000e+00 : f32
    %13 = vector.broadcast %cst_12 : f32 to vector<8x32xf32>
    %14 = vector.extract_strided_slice %7 {offsets = [0, 0], sizes = [8, 128], strides = [1, 1]} : vector<64x128xf32> to vector<8x128xf32>
    %15 = arith.truncf %13 : vector<8x32xf32> to vector<8x32xbf16>
    %cst_13 = arith.constant dense<0.000000e+00> : vector<8x128xf32>
    %16 = tpu.matmul %15, %8, %cst_13 {dimension_numbers = #tpu.dot_dimension_numbers<[1], [0], [0], [1], [0, 0, 1, 1], [], []>} : vector<8x32xbf16>, vector<32x128xbf16>, vector<8x128xf32> -> vector<8x128xf32>
    %17 = arith.addf %14, %16 : vector<8x128xf32>
    %18 = arith.negf %17 : vector<8x128xf32>
    %19 = math.exp %18 : vector<8x128xf32>
    %cst_14 = arith.constant 1.000000e+00 : f32
    %20 = vector.broadcast %cst_14 : f32 to vector<8x128xf32>
    %21 = arith.addf %20, %19 : vector<8x128xf32>
    %22 = arith.divf %20, %21 : vector<8x128xf32>
    %23 = math.tanh %17 : vector<8x128xf32>
    %24 = vector.extract_strided_slice %22 {offsets = [0, 0], sizes = [8, 32], strides = [1, 1]} : vector<8x128xf32> to vector<8x32xf32>
    %25 = vector.extract_strided_slice %22 {offsets = [0, 32], sizes = [8, 32], strides = [1, 1]} : vector<8x128xf32> to vector<8x32xf32>
    %26 = vector.extract_strided_slice %23 {offsets = [0, 64], sizes = [8, 32], strides = [1, 1]} : vector<8x128xf32> to vector<8x32xf32>
    %27 = vector.extract_strided_slice %22 {offsets = [0, 96], sizes = [8, 32], strides = [1, 1]} : vector<8x128xf32> to vector<8x32xf32>
    %28 = arith.mulf %25, %13 : vector<8x32xf32>
    %29 = arith.mulf %24, %26 : vector<8x32xf32>
    %30 = arith.addf %28, %29 : vector<8x32xf32>
    %31 = math.tanh %30 : vector<8x32xf32>
    %32 = arith.mulf %27, %31 : vector<8x32xf32>
    %33 = tpu.concatenate %32, %13 in 1 : vector<8x32xf32>, vector<8x32xf32> -> vector<8x64xf32>
    %34 = arith.truncf %33 : vector<8x64xf32> to vector<8x64xbf16>
    %cst_15 = arith.constant dense<0.000000e+00> : vector<8x128xf32>
    %35 = tpu.matmul %34, %9, %cst_15 {dimension_numbers = #tpu.dot_dimension_numbers<[1], [0], [0], [1], [0, 0, 1, 1], [], []>} : vector<8x64xbf16>, vector<64x128xbf16>, vector<8x128xf32> -> vector<8x128xf32>
    %36 = arith.addf %35, %12 : vector<8x128xf32>
    %37 = arith.negf %36 : vector<8x128xf32>
    %38 = math.exp %37 : vector<8x128xf32>
    %cst_16 = arith.constant 1.000000e+00 : f32
    %39 = vector.broadcast %cst_16 : f32 to vector<8x128xf32>
    %40 = arith.addf %39, %38 : vector<8x128xf32>
    %41 = arith.divf %39, %40 : vector<8x128xf32>
    %42 = math.tanh %36 : vector<8x128xf32>
    %43 = vector.extract_strided_slice %41 {offsets = [0, 0], sizes = [8, 32], strides = [1, 1]} : vector<8x128xf32> to vector<8x32xf32>
    %44 = vector.extract_strided_slice %41 {offsets = [0, 32], sizes = [8, 32], strides = [1, 1]} : vector<8x128xf32> to vector<8x32xf32>
    %45 = vector.extract_strided_slice %42 {offsets = [0, 64], sizes = [8, 32], strides = [1, 1]} : vector<8x128xf32> to vector<8x32xf32>
    %46 = vector.extract_strided_slice %41 {offsets = [0, 96], sizes = [8, 32], strides = [1, 1]} : vector<8x128xf32> to vector<8x32xf32>
    %47 = arith.mulf %44, %13 : vector<8x32xf32>
    %48 = arith.mulf %43, %45 : vector<8x32xf32>
    %49 = arith.addf %47, %48 : vector<8x32xf32>
    %50 = math.tanh %49 : vector<8x32xf32>
    %51 = arith.mulf %46, %50 : vector<8x32xf32>
    %c0_17 = arith.constant 0 : index
    %c0_18 = arith.constant 0 : index
    %c0_19 = arith.constant 0 : index
    %52 = vector.load %arg6[%c0_17, %c0_18, %c0_19] : memref<8x8x32xf32, #tpu.memory_space<vmem>>, vector<1x8x32xf32>
    %53 = vector.shape_cast %52 : vector<1x8x32xf32> to vector<8x32xf32>
    %54 = vector.shape_cast %51 : vector<8x32xf32> to vector<1x8x32xf32>
    tpu.vector_store %arg6[%c0_17, %c0_18, %c0_19], %54 {strides = array<i32>} : memref<8x8x32xf32, #tpu.memory_space<vmem>>, vector<1x8x32xf32>,
    %55 = vector.extract_strided_slice %7 {offsets = [8, 0], sizes = [8, 128], strides = [1, 1]} : vector<64x128xf32> to vector<8x128xf32>
    %56 = arith.truncf %32 : vector<8x32xf32> to vector<8x32xbf16>
    %cst_20 = arith.constant dense<0.000000e+00> : vector<8x128xf32>
    %57 = tpu.matmul %56, %8, %cst_20 {dimension_numbers = #tpu.dot_dimension_numbers<[1], [0], [0], [1], [0, 0, 1, 1], [], []>} : vector<8x32xbf16>, vector<32x128xbf16>, vector<8x128xf32> -> vector<8x128xf32>
    %58 = arith.addf %55, %57 : vector<8x128xf32>
    %59 = arith.negf %58 : vector<8x128xf32>
    %60 = math.exp %59 : vector<8x128xf32>
    %cst_21 = arith.constant 1.000000e+00 : f32
    %61 = vector.broadcast %cst_21 : f32 to vector<8x128xf32>
    %62 = arith.addf %61, %60 : vector<8x128xf32>
    %63 = arith.divf %61, %62 : vector<8x128xf32>
    %64 = math.tanh %58 : vector<8x128xf32>
    %65 = vector.extract_strided_slice %63 {offsets = [0, 0], sizes = [8, 32], strides = [1, 1]} : vector<8x128xf32> to vector<8x32xf32>
    %66 = vector.extract_strided_slice %63 {offsets = [0, 32], sizes = [8, 32], strides = [1, 1]} : vector<8x128xf32> to vector<8x32xf32>
    %67 = vector.extract_strided_slice %64 {offsets = [0, 64], sizes = [8, 32], strides = [1, 1]} : vector<8x128xf32> to vector<8x32xf32>
    %68 = vector.extract_strided_slice %63 {offsets = [0, 96], sizes = [8, 32], strides = [1, 1]} : vector<8x128xf32> to vector<8x32xf32>
    %69 = arith.mulf %66, %30 : vector<8x32xf32>
    %70 = arith.mulf %65, %67 : vector<8x32xf32>
    %71 = arith.addf %69, %70 : vector<8x32xf32>
    %72 = math.tanh %71 : vector<8x32xf32>
    %73 = arith.mulf %68, %72 : vector<8x32xf32>
    %74 = tpu.concatenate %73, %51 in 1 : vector<8x32xf32>, vector<8x32xf32> -> vector<8x64xf32>
    %75 = arith.truncf %74 : vector<8x64xf32> to vector<8x64xbf16>
    %cst_22 = arith.constant dense<0.000000e+00> : vector<8x128xf32>
    %76 = tpu.matmul %75, %9, %cst_22 {dimension_numbers = #tpu.dot_dimension_numbers<[1], [0], [0], [1], [0, 0, 1, 1], [], []>} : vector<8x64xbf16>, vector<64x128xbf16>, vector<8x128xf32> -> vector<8x128xf32>
    %77 = arith.addf %76, %12 : vector<8x128xf32>
    %78 = arith.negf %77 : vector<8x128xf32>
    %79 = math.exp %78 : vector<8x128xf32>
    %cst_23 = arith.constant 1.000000e+00 : f32
    %80 = vector.broadcast %cst_23 : f32 to vector<8x128xf32>
    %81 = arith.addf %80, %79 : vector<8x128xf32>
    %82 = arith.divf %80, %81 : vector<8x128xf32>
    %83 = math.tanh %77 : vector<8x128xf32>
    %84 = vector.extract_strided_slice %82 {offsets = [0, 0], sizes = [8, 32], strides = [1, 1]} : vector<8x128xf32> to vector<8x32xf32>
    %85 = vector.extract_strided_slice %82 {offsets = [0, 32], sizes = [8, 32], strides = [1, 1]} : vector<8x128xf32> to vector<8x32xf32>
    %86 = vector.extract_strided_slice %83 {offsets = [0, 64], sizes = [8, 32], strides = [1, 1]} : vector<8x128xf32> to vector<8x32xf32>
    %87 = vector.extract_strided_slice %82 {offsets = [0, 96], sizes = [8, 32], strides = [1, 1]} : vector<8x128xf32> to vector<8x32xf32>
    %88 = arith.mulf %85, %49 : vector<8x32xf32>
    %89 = arith.mulf %84, %86 : vector<8x32xf32>
    %90 = arith.addf %88, %89 : vector<8x32xf32>
    %91 = math.tanh %90 : vector<8x32xf32>
    %92 = arith.mulf %87, %91 : vector<8x32xf32>
    %c1 = arith.constant 1 : index
    %c0_24 = arith.constant 0 : index
    %c0_25 = arith.constant 0 : index
    %93 = vector.load %arg6[%c1, %c0_24, %c0_25] : memref<8x8x32xf32, #tpu.memory_space<vmem>>, vector<1x8x32xf32>
    %94 = vector.shape_cast %93 : vector<1x8x32xf32> to vector<8x32xf32>
    %95 = vector.shape_cast %92 : vector<8x32xf32> to vector<1x8x32xf32>
    tpu.vector_store %arg6[%c1, %c0_24, %c0_25], %95 {strides = array<i32>} : memref<8x8x32xf32, #tpu.memory_space<vmem>>, vector<1x8x32xf32>,
    %96 = vector.extract_strided_slice %7 {offsets = [16, 0], sizes = [8, 128], strides = [1, 1]} : vector<64x128xf32> to vector<8x128xf32>
    %97 = arith.truncf %73 : vector<8x32xf32> to vector<8x32xbf16>
    %cst_26 = arith.constant dense<0.000000e+00> : vector<8x128xf32>
    %98 = tpu.matmul %97, %8, %cst_26 {dimension_numbers = #tpu.dot_dimension_numbers<[1], [0], [0], [1], [0, 0, 1, 1], [], []>} : vector<8x32xbf16>, vector<32x128xbf16>, vector<8x128xf32> -> vector<8x128xf32>
    %99 = arith.addf %96, %98 : vector<8x128xf32>
    %100 = arith.negf %99 : vector<8x128xf32>
    %101 = math.exp %100 : vector<8x128xf32>
    %cst_27 = arith.constant 1.000000e+00 : f32
    %102 = vector.broadcast %cst_27 : f32 to vector<8x128xf32>
    %103 = arith.addf %102, %101 : vector<8x128xf32>
    %104 = arith.divf %102, %103 : vector<8x128xf32>
    %105 = math.tanh %99 : vector<8x128xf32>
    %106 = vector.extract_strided_slice %104 {offsets = [0, 0], sizes = [8, 32], strides = [1, 1]} : vector<8x128xf32> to vector<8x32xf32>
    %107 = vector.extract_strided_slice %104 {offsets = [0, 32], sizes = [8, 32], strides = [1, 1]} : vector<8x128xf32> to vector<8x32xf32>
    %108 = vector.extract_strided_slice %105 {offsets = [0, 64], sizes = [8, 32], strides = [1, 1]} : vector<8x128xf32> to vector<8x32xf32>
    %109 = vector.extract_strided_slice %104 {offsets = [0, 96], sizes = [8, 32], strides = [1, 1]} : vector<8x128xf32> to vector<8x32xf32>
    %110 = arith.mulf %107, %71 : vector<8x32xf32>
    %111 = arith.mulf %106, %108 : vector<8x32xf32>
    %112 = arith.addf %110, %111 : vector<8x32xf32>
    %113 = math.tanh %112 : vector<8x32xf32>
    %114 = arith.mulf %109, %113 : vector<8x32xf32>
    %115 = tpu.concatenate %114, %92 in 1 : vector<8x32xf32>, vector<8x32xf32> -> vector<8x64xf32>
    %116 = arith.truncf %115 : vector<8x64xf32> to vector<8x64xbf16>
    %cst_28 = arith.constant dense<0.000000e+00> : vector<8x128xf32>
    %117 = tpu.matmul %116, %9, %cst_28 {dimension_numbers = #tpu.dot_dimension_numbers<[1], [0], [0], [1], [0, 0, 1, 1], [], []>} : vector<8x64xbf16>, vector<64x128xbf16>, vector<8x128xf32> -> vector<8x128xf32>
    %118 = arith.addf %117, %12 : vector<8x128xf32>
    %119 = arith.negf %118 : vector<8x128xf32>
    %120 = math.exp %119 : vector<8x128xf32>
    %cst_29 = arith.constant 1.000000e+00 : f32
    %121 = vector.broadcast %cst_29 : f32 to vector<8x128xf32>
    %122 = arith.addf %121, %120 : vector<8x128xf32>
    %123 = arith.divf %121, %122 : vector<8x128xf32>
    %124 = math.tanh %118 : vector<8x128xf32>
    %125 = vector.extract_strided_slice %123 {offsets = [0, 0], sizes = [8, 32], strides = [1, 1]} : vector<8x128xf32> to vector<8x32xf32>
    %126 = vector.extract_strided_slice %123 {offsets = [0, 32], sizes = [8, 32], strides = [1, 1]} : vector<8x128xf32> to vector<8x32xf32>
    %127 = vector.extract_strided_slice %124 {offsets = [0, 64], sizes = [8, 32], strides = [1, 1]} : vector<8x128xf32> to vector<8x32xf32>
    %128 = vector.extract_strided_slice %123 {offsets = [0, 96], sizes = [8, 32], strides = [1, 1]} : vector<8x128xf32> to vector<8x32xf32>
    %129 = arith.mulf %126, %90 : vector<8x32xf32>
    %130 = arith.mulf %125, %127 : vector<8x32xf32>
    %131 = arith.addf %129, %130 : vector<8x32xf32>
    %132 = math.tanh %131 : vector<8x32xf32>
    %133 = arith.mulf %128, %132 : vector<8x32xf32>
    %c2 = arith.constant 2 : index
    %c0_30 = arith.constant 0 : index
    %c0_31 = arith.constant 0 : index
    %134 = vector.load %arg6[%c2, %c0_30, %c0_31] : memref<8x8x32xf32, #tpu.memory_space<vmem>>, vector<1x8x32xf32>
    %135 = vector.shape_cast %134 : vector<1x8x32xf32> to vector<8x32xf32>
    %136 = vector.shape_cast %133 : vector<8x32xf32> to vector<1x8x32xf32>
    tpu.vector_store %arg6[%c2, %c0_30, %c0_31], %136 {strides = array<i32>} : memref<8x8x32xf32, #tpu.memory_space<vmem>>, vector<1x8x32xf32>,
    %137 = vector.extract_strided_slice %7 {offsets = [24, 0], sizes = [8, 128], strides = [1, 1]} : vector<64x128xf32> to vector<8x128xf32>
    %138 = arith.truncf %114 : vector<8x32xf32> to vector<8x32xbf16>
    %cst_32 = arith.constant dense<0.000000e+00> : vector<8x128xf32>
    %139 = tpu.matmul %138, %8, %cst_32 {dimension_numbers = #tpu.dot_dimension_numbers<[1], [0], [0], [1], [0, 0, 1, 1], [], []>} : vector<8x32xbf16>, vector<32x128xbf16>, vector<8x128xf32> -> vector<8x128xf32>
    %140 = arith.addf %137, %139 : vector<8x128xf32>
    %141 = arith.negf %140 : vector<8x128xf32>
    %142 = math.exp %141 : vector<8x128xf32>
    %cst_33 = arith.constant 1.000000e+00 : f32
    %143 = vector.broadcast %cst_33 : f32 to vector<8x128xf32>
    %144 = arith.addf %143, %142 : vector<8x128xf32>
    %145 = arith.divf %143, %144 : vector<8x128xf32>
    %146 = math.tanh %140 : vector<8x128xf32>
    %147 = vector.extract_strided_slice %145 {offsets = [0, 0], sizes = [8, 32], strides = [1, 1]} : vector<8x128xf32> to vector<8x32xf32>
    %148 = vector.extract_strided_slice %145 {offsets = [0, 32], sizes = [8, 32], strides = [1, 1]} : vector<8x128xf32> to vector<8x32xf32>
    %149 = vector.extract_strided_slice %146 {offsets = [0, 64], sizes = [8, 32], strides = [1, 1]} : vector<8x128xf32> to vector<8x32xf32>
    %150 = vector.extract_strided_slice %145 {offsets = [0, 96], sizes = [8, 32], strides = [1, 1]} : vector<8x128xf32> to vector<8x32xf32>
    %151 = arith.mulf %148, %112 : vector<8x32xf32>
    %152 = arith.mulf %147, %149 : vector<8x32xf32>
    %153 = arith.addf %151, %152 : vector<8x32xf32>
    %154 = math.tanh %153 : vector<8x32xf32>
    %155 = arith.mulf %150, %154 : vector<8x32xf32>
    %156 = tpu.concatenate %155, %133 in 1 : vector<8x32xf32>, vector<8x32xf32> -> vector<8x64xf32>
    %157 = arith.truncf %156 : vector<8x64xf32> to vector<8x64xbf16>
    %cst_34 = arith.constant dense<0.000000e+00> : vector<8x128xf32>
    %158 = tpu.matmul %157, %9, %cst_34 {dimension_numbers = #tpu.dot_dimension_numbers<[1], [0], [0], [1], [0, 0, 1, 1], [], []>} : vector<8x64xbf16>, vector<64x128xbf16>, vector<8x128xf32> -> vector<8x128xf32>
    %159 = arith.addf %158, %12 : vector<8x128xf32>
    %160 = arith.negf %159 : vector<8x128xf32>
    %161 = math.exp %160 : vector<8x128xf32>
    %cst_35 = arith.constant 1.000000e+00 : f32
    %162 = vector.broadcast %cst_35 : f32 to vector<8x128xf32>
    %163 = arith.addf %162, %161 : vector<8x128xf32>
    %164 = arith.divf %162, %163 : vector<8x128xf32>
    %165 = math.tanh %159 : vector<8x128xf32>
    %166 = vector.extract_strided_slice %164 {offsets = [0, 0], sizes = [8, 32], strides = [1, 1]} : vector<8x128xf32> to vector<8x32xf32>
    %167 = vector.extract_strided_slice %164 {offsets = [0, 32], sizes = [8, 32], strides = [1, 1]} : vector<8x128xf32> to vector<8x32xf32>
    %168 = vector.extract_strided_slice %165 {offsets = [0, 64], sizes = [8, 32], strides = [1, 1]} : vector<8x128xf32> to vector<8x32xf32>
    %169 = vector.extract_strided_slice %164 {offsets = [0, 96], sizes = [8, 32], strides = [1, 1]} : vector<8x128xf32> to vector<8x32xf32>
    %170 = arith.mulf %167, %131 : vector<8x32xf32>
    %171 = arith.mulf %166, %168 : vector<8x32xf32>
    %172 = arith.addf %170, %171 : vector<8x32xf32>
    %173 = math.tanh %172 : vector<8x32xf32>
    %174 = arith.mulf %169, %173 : vector<8x32xf32>
    %c3 = arith.constant 3 : index
    %c0_36 = arith.constant 0 : index
    %c0_37 = arith.constant 0 : index
    %175 = vector.load %arg6[%c3, %c0_36, %c0_37] : memref<8x8x32xf32, #tpu.memory_space<vmem>>, vector<1x8x32xf32>
    %176 = vector.shape_cast %175 : vector<1x8x32xf32> to vector<8x32xf32>
    %177 = vector.shape_cast %174 : vector<8x32xf32> to vector<1x8x32xf32>
    tpu.vector_store %arg6[%c3, %c0_36, %c0_37], %177 {strides = array<i32>} : memref<8x8x32xf32, #tpu.memory_space<vmem>>, vector<1x8x32xf32>,
    %178 = vector.extract_strided_slice %7 {offsets = [32, 0], sizes = [8, 128], strides = [1, 1]} : vector<64x128xf32> to vector<8x128xf32>
    %179 = arith.truncf %155 : vector<8x32xf32> to vector<8x32xbf16>
    %cst_38 = arith.constant dense<0.000000e+00> : vector<8x128xf32>
    %180 = tpu.matmul %179, %8, %cst_38 {dimension_numbers = #tpu.dot_dimension_numbers<[1], [0], [0], [1], [0, 0, 1, 1], [], []>} : vector<8x32xbf16>, vector<32x128xbf16>, vector<8x128xf32> -> vector<8x128xf32>
    %181 = arith.addf %178, %180 : vector<8x128xf32>
    %182 = arith.negf %181 : vector<8x128xf32>
    %183 = math.exp %182 : vector<8x128xf32>
    %cst_39 = arith.constant 1.000000e+00 : f32
    %184 = vector.broadcast %cst_39 : f32 to vector<8x128xf32>
    %185 = arith.addf %184, %183 : vector<8x128xf32>
    %186 = arith.divf %184, %185 : vector<8x128xf32>
    %187 = math.tanh %181 : vector<8x128xf32>
    %188 = vector.extract_strided_slice %186 {offsets = [0, 0], sizes = [8, 32], strides = [1, 1]} : vector<8x128xf32> to vector<8x32xf32>
    %189 = vector.extract_strided_slice %186 {offsets = [0, 32], sizes = [8, 32], strides = [1, 1]} : vector<8x128xf32> to vector<8x32xf32>
    %190 = vector.extract_strided_slice %187 {offsets = [0, 64], sizes = [8, 32], strides = [1, 1]} : vector<8x128xf32> to vector<8x32xf32>
    %191 = vector.extract_strided_slice %186 {offsets = [0, 96], sizes = [8, 32], strides = [1, 1]} : vector<8x128xf32> to vector<8x32xf32>
    %192 = arith.mulf %189, %153 : vector<8x32xf32>
    %193 = arith.mulf %188, %190 : vector<8x32xf32>
    %194 = arith.addf %192, %193 : vector<8x32xf32>
    %195 = math.tanh %194 : vector<8x32xf32>
    %196 = arith.mulf %191, %195 : vector<8x32xf32>
    %197 = tpu.concatenate %196, %174 in 1 : vector<8x32xf32>, vector<8x32xf32> -> vector<8x64xf32>
    %198 = arith.truncf %197 : vector<8x64xf32> to vector<8x64xbf16>
    %cst_40 = arith.constant dense<0.000000e+00> : vector<8x128xf32>
    %199 = tpu.matmul %198, %9, %cst_40 {dimension_numbers = #tpu.dot_dimension_numbers<[1], [0], [0], [1], [0, 0, 1, 1], [], []>} : vector<8x64xbf16>, vector<64x128xbf16>, vector<8x128xf32> -> vector<8x128xf32>
    %200 = arith.addf %199, %12 : vector<8x128xf32>
    %201 = arith.negf %200 : vector<8x128xf32>
    %202 = math.exp %201 : vector<8x128xf32>
    %cst_41 = arith.constant 1.000000e+00 : f32
    %203 = vector.broadcast %cst_41 : f32 to vector<8x128xf32>
    %204 = arith.addf %203, %202 : vector<8x128xf32>
    %205 = arith.divf %203, %204 : vector<8x128xf32>
    %206 = math.tanh %200 : vector<8x128xf32>
    %207 = vector.extract_strided_slice %205 {offsets = [0, 0], sizes = [8, 32], strides = [1, 1]} : vector<8x128xf32> to vector<8x32xf32>
    %208 = vector.extract_strided_slice %205 {offsets = [0, 32], sizes = [8, 32], strides = [1, 1]} : vector<8x128xf32> to vector<8x32xf32>
    %209 = vector.extract_strided_slice %206 {offsets = [0, 64], sizes = [8, 32], strides = [1, 1]} : vector<8x128xf32> to vector<8x32xf32>
    %210 = vector.extract_strided_slice %205 {offsets = [0, 96], sizes = [8, 32], strides = [1, 1]} : vector<8x128xf32> to vector<8x32xf32>
    %211 = arith.mulf %208, %172 : vector<8x32xf32>
    %212 = arith.mulf %207, %209 : vector<8x32xf32>
    %213 = arith.addf %211, %212 : vector<8x32xf32>
    %214 = math.tanh %213 : vector<8x32xf32>
    %215 = arith.mulf %210, %214 : vector<8x32xf32>
    %c4 = arith.constant 4 : index
    %c0_42 = arith.constant 0 : index
    %c0_43 = arith.constant 0 : index
    %216 = vector.load %arg6[%c4, %c0_42, %c0_43] : memref<8x8x32xf32, #tpu.memory_space<vmem>>, vector<1x8x32xf32>
    %217 = vector.shape_cast %216 : vector<1x8x32xf32> to vector<8x32xf32>
    %218 = vector.shape_cast %215 : vector<8x32xf32> to vector<1x8x32xf32>
    tpu.vector_store %arg6[%c4, %c0_42, %c0_43], %218 {strides = array<i32>} : memref<8x8x32xf32, #tpu.memory_space<vmem>>, vector<1x8x32xf32>,
    %219 = vector.extract_strided_slice %7 {offsets = [40, 0], sizes = [8, 128], strides = [1, 1]} : vector<64x128xf32> to vector<8x128xf32>
    %220 = arith.truncf %196 : vector<8x32xf32> to vector<8x32xbf16>
    %cst_44 = arith.constant dense<0.000000e+00> : vector<8x128xf32>
    %221 = tpu.matmul %220, %8, %cst_44 {dimension_numbers = #tpu.dot_dimension_numbers<[1], [0], [0], [1], [0, 0, 1, 1], [], []>} : vector<8x32xbf16>, vector<32x128xbf16>, vector<8x128xf32> -> vector<8x128xf32>
    %222 = arith.addf %219, %221 : vector<8x128xf32>
    %223 = arith.negf %222 : vector<8x128xf32>
    %224 = math.exp %223 : vector<8x128xf32>
    %cst_45 = arith.constant 1.000000e+00 : f32
    %225 = vector.broadcast %cst_45 : f32 to vector<8x128xf32>
    %226 = arith.addf %225, %224 : vector<8x128xf32>
    %227 = arith.divf %225, %226 : vector<8x128xf32>
    %228 = math.tanh %222 : vector<8x128xf32>
    %229 = vector.extract_strided_slice %227 {offsets = [0, 0], sizes = [8, 32], strides = [1, 1]} : vector<8x128xf32> to vector<8x32xf32>
    %230 = vector.extract_strided_slice %227 {offsets = [0, 32], sizes = [8, 32], strides = [1, 1]} : vector<8x128xf32> to vector<8x32xf32>
    %231 = vector.extract_strided_slice %228 {offsets = [0, 64], sizes = [8, 32], strides = [1, 1]} : vector<8x128xf32> to vector<8x32xf32>
    %232 = vector.extract_strided_slice %227 {offsets = [0, 96], sizes = [8, 32], strides = [1, 1]} : vector<8x128xf32> to vector<8x32xf32>
    %233 = arith.mulf %230, %194 : vector<8x32xf32>
    %234 = arith.mulf %229, %231 : vector<8x32xf32>
    %235 = arith.addf %233, %234 : vector<8x32xf32>
    %236 = math.tanh %235 : vector<8x32xf32>
    %237 = arith.mulf %232, %236 : vector<8x32xf32>
    %238 = tpu.concatenate %237, %215 in 1 : vector<8x32xf32>, vector<8x32xf32> -> vector<8x64xf32>
    %239 = arith.truncf %238 : vector<8x64xf32> to vector<8x64xbf16>
    %cst_46 = arith.constant dense<0.000000e+00> : vector<8x128xf32>
    %240 = tpu.matmul %239, %9, %cst_46 {dimension_numbers = #tpu.dot_dimension_numbers<[1], [0], [0], [1], [0, 0, 1, 1], [], []>} : vector<8x64xbf16>, vector<64x128xbf16>, vector<8x128xf32> -> vector<8x128xf32>
    %241 = arith.addf %240, %12 : vector<8x128xf32>
    %242 = arith.negf %241 : vector<8x128xf32>
    %243 = math.exp %242 : vector<8x128xf32>
    %cst_47 = arith.constant 1.000000e+00 : f32
    %244 = vector.broadcast %cst_47 : f32 to vector<8x128xf32>
    %245 = arith.addf %244, %243 : vector<8x128xf32>
    %246 = arith.divf %244, %245 : vector<8x128xf32>
    %247 = math.tanh %241 : vector<8x128xf32>
    %248 = vector.extract_strided_slice %246 {offsets = [0, 0], sizes = [8, 32], strides = [1, 1]} : vector<8x128xf32> to vector<8x32xf32>
    %249 = vector.extract_strided_slice %246 {offsets = [0, 32], sizes = [8, 32], strides = [1, 1]} : vector<8x128xf32> to vector<8x32xf32>
    %250 = vector.extract_strided_slice %247 {offsets = [0, 64], sizes = [8, 32], strides = [1, 1]} : vector<8x128xf32> to vector<8x32xf32>
    %251 = vector.extract_strided_slice %246 {offsets = [0, 96], sizes = [8, 32], strides = [1, 1]} : vector<8x128xf32> to vector<8x32xf32>
    %252 = arith.mulf %249, %213 : vector<8x32xf32>
    %253 = arith.mulf %248, %250 : vector<8x32xf32>
    %254 = arith.addf %252, %253 : vector<8x32xf32>
    %255 = math.tanh %254 : vector<8x32xf32>
    %256 = arith.mulf %251, %255 : vector<8x32xf32>
    %c5 = arith.constant 5 : index
    %c0_48 = arith.constant 0 : index
    %c0_49 = arith.constant 0 : index
    %257 = vector.load %arg6[%c5, %c0_48, %c0_49] : memref<8x8x32xf32, #tpu.memory_space<vmem>>, vector<1x8x32xf32>
    %258 = vector.shape_cast %257 : vector<1x8x32xf32> to vector<8x32xf32>
    %259 = vector.shape_cast %256 : vector<8x32xf32> to vector<1x8x32xf32>
    tpu.vector_store %arg6[%c5, %c0_48, %c0_49], %259 {strides = array<i32>} : memref<8x8x32xf32, #tpu.memory_space<vmem>>, vector<1x8x32xf32>,
    %260 = vector.extract_strided_slice %7 {offsets = [48, 0], sizes = [8, 128], strides = [1, 1]} : vector<64x128xf32> to vector<8x128xf32>
    %261 = arith.truncf %237 : vector<8x32xf32> to vector<8x32xbf16>
    %cst_50 = arith.constant dense<0.000000e+00> : vector<8x128xf32>
    %262 = tpu.matmul %261, %8, %cst_50 {dimension_numbers = #tpu.dot_dimension_numbers<[1], [0], [0], [1], [0, 0, 1, 1], [], []>} : vector<8x32xbf16>, vector<32x128xbf16>, vector<8x128xf32> -> vector<8x128xf32>
    %263 = arith.addf %260, %262 : vector<8x128xf32>
    %264 = arith.negf %263 : vector<8x128xf32>
    %265 = math.exp %264 : vector<8x128xf32>
    %cst_51 = arith.constant 1.000000e+00 : f32
    %266 = vector.broadcast %cst_51 : f32 to vector<8x128xf32>
    %267 = arith.addf %266, %265 : vector<8x128xf32>
    %268 = arith.divf %266, %267 : vector<8x128xf32>
    %269 = math.tanh %263 : vector<8x128xf32>
    %270 = vector.extract_strided_slice %268 {offsets = [0, 0], sizes = [8, 32], strides = [1, 1]} : vector<8x128xf32> to vector<8x32xf32>
    %271 = vector.extract_strided_slice %268 {offsets = [0, 32], sizes = [8, 32], strides = [1, 1]} : vector<8x128xf32> to vector<8x32xf32>
    %272 = vector.extract_strided_slice %269 {offsets = [0, 64], sizes = [8, 32], strides = [1, 1]} : vector<8x128xf32> to vector<8x32xf32>
    %273 = vector.extract_strided_slice %268 {offsets = [0, 96], sizes = [8, 32], strides = [1, 1]} : vector<8x128xf32> to vector<8x32xf32>
    %274 = arith.mulf %271, %235 : vector<8x32xf32>
    %275 = arith.mulf %270, %272 : vector<8x32xf32>
    %276 = arith.addf %274, %275 : vector<8x32xf32>
    %277 = math.tanh %276 : vector<8x32xf32>
    %278 = arith.mulf %273, %277 : vector<8x32xf32>
    %279 = tpu.concatenate %278, %256 in 1 : vector<8x32xf32>, vector<8x32xf32> -> vector<8x64xf32>
    %280 = arith.truncf %279 : vector<8x64xf32> to vector<8x64xbf16>
    %cst_52 = arith.constant dense<0.000000e+00> : vector<8x128xf32>
    %281 = tpu.matmul %280, %9, %cst_52 {dimension_numbers = #tpu.dot_dimension_numbers<[1], [0], [0], [1], [0, 0, 1, 1], [], []>} : vector<8x64xbf16>, vector<64x128xbf16>, vector<8x128xf32> -> vector<8x128xf32>
    %282 = arith.addf %281, %12 : vector<8x128xf32>
    %283 = arith.negf %282 : vector<8x128xf32>
    %284 = math.exp %283 : vector<8x128xf32>
    %cst_53 = arith.constant 1.000000e+00 : f32
    %285 = vector.broadcast %cst_53 : f32 to vector<8x128xf32>
    %286 = arith.addf %285, %284 : vector<8x128xf32>
    %287 = arith.divf %285, %286 : vector<8x128xf32>
    %288 = math.tanh %282 : vector<8x128xf32>
    %289 = vector.extract_strided_slice %287 {offsets = [0, 0], sizes = [8, 32], strides = [1, 1]} : vector<8x128xf32> to vector<8x32xf32>
    %290 = vector.extract_strided_slice %287 {offsets = [0, 32], sizes = [8, 32], strides = [1, 1]} : vector<8x128xf32> to vector<8x32xf32>
    %291 = vector.extract_strided_slice %288 {offsets = [0, 64], sizes = [8, 32], strides = [1, 1]} : vector<8x128xf32> to vector<8x32xf32>
    %292 = vector.extract_strided_slice %287 {offsets = [0, 96], sizes = [8, 32], strides = [1, 1]} : vector<8x128xf32> to vector<8x32xf32>
    %293 = arith.mulf %290, %254 : vector<8x32xf32>
    %294 = arith.mulf %289, %291 : vector<8x32xf32>
    %295 = arith.addf %293, %294 : vector<8x32xf32>
    %296 = math.tanh %295 : vector<8x32xf32>
    %297 = arith.mulf %292, %296 : vector<8x32xf32>
    %c6 = arith.constant 6 : index
    %c0_54 = arith.constant 0 : index
    %c0_55 = arith.constant 0 : index
    %298 = vector.load %arg6[%c6, %c0_54, %c0_55] : memref<8x8x32xf32, #tpu.memory_space<vmem>>, vector<1x8x32xf32>
    %299 = vector.shape_cast %298 : vector<1x8x32xf32> to vector<8x32xf32>
    %300 = vector.shape_cast %297 : vector<8x32xf32> to vector<1x8x32xf32>
    tpu.vector_store %arg6[%c6, %c0_54, %c0_55], %300 {strides = array<i32>} : memref<8x8x32xf32, #tpu.memory_space<vmem>>, vector<1x8x32xf32>,
    %301 = vector.extract_strided_slice %7 {offsets = [56, 0], sizes = [8, 128], strides = [1, 1]} : vector<64x128xf32> to vector<8x128xf32>
    %302 = arith.truncf %278 : vector<8x32xf32> to vector<8x32xbf16>
    %cst_56 = arith.constant dense<0.000000e+00> : vector<8x128xf32>
    %303 = tpu.matmul %302, %8, %cst_56 {dimension_numbers = #tpu.dot_dimension_numbers<[1], [0], [0], [1], [0, 0, 1, 1], [], []>} : vector<8x32xbf16>, vector<32x128xbf16>, vector<8x128xf32> -> vector<8x128xf32>
    %304 = arith.addf %301, %303 : vector<8x128xf32>
    %305 = arith.negf %304 : vector<8x128xf32>
    %306 = math.exp %305 : vector<8x128xf32>
    %cst_57 = arith.constant 1.000000e+00 : f32
    %307 = vector.broadcast %cst_57 : f32 to vector<8x128xf32>
    %308 = arith.addf %307, %306 : vector<8x128xf32>
    %309 = arith.divf %307, %308 : vector<8x128xf32>
    %310 = math.tanh %304 : vector<8x128xf32>
    %311 = vector.extract_strided_slice %309 {offsets = [0, 0], sizes = [8, 32], strides = [1, 1]} : vector<8x128xf32> to vector<8x32xf32>
    %312 = vector.extract_strided_slice %309 {offsets = [0, 32], sizes = [8, 32], strides = [1, 1]} : vector<8x128xf32> to vector<8x32xf32>
    %313 = vector.extract_strided_slice %310 {offsets = [0, 64], sizes = [8, 32], strides = [1, 1]} : vector<8x128xf32> to vector<8x32xf32>
    %314 = vector.extract_strided_slice %309 {offsets = [0, 96], sizes = [8, 32], strides = [1, 1]} : vector<8x128xf32> to vector<8x32xf32>
    %315 = arith.mulf %312, %276 : vector<8x32xf32>
    %316 = arith.mulf %311, %313 : vector<8x32xf32>
    %317 = arith.addf %315, %316 : vector<8x32xf32>
    %318 = math.tanh %317 : vector<8x32xf32>
    %319 = arith.mulf %314, %318 : vector<8x32xf32>
    %320 = tpu.concatenate %319, %297 in 1 : vector<8x32xf32>, vector<8x32xf32> -> vector<8x64xf32>
    %321 = arith.truncf %320 : vector<8x64xf32> to vector<8x64xbf16>
    %cst_58 = arith.constant dense<0.000000e+00> : vector<8x128xf32>
    %322 = tpu.matmul %321, %9, %cst_58 {dimension_numbers = #tpu.dot_dimension_numbers<[1], [0], [0], [1], [0, 0, 1, 1], [], []>} : vector<8x64xbf16>, vector<64x128xbf16>, vector<8x128xf32> -> vector<8x128xf32>
    %323 = arith.addf %322, %12 : vector<8x128xf32>
    %324 = arith.negf %323 : vector<8x128xf32>
    %325 = math.exp %324 : vector<8x128xf32>
    %cst_59 = arith.constant 1.000000e+00 : f32
    %326 = vector.broadcast %cst_59 : f32 to vector<8x128xf32>
    %327 = arith.addf %326, %325 : vector<8x128xf32>
    %328 = arith.divf %326, %327 : vector<8x128xf32>
    %329 = math.tanh %323 : vector<8x128xf32>
    %330 = vector.extract_strided_slice %328 {offsets = [0, 0], sizes = [8, 32], strides = [1, 1]} : vector<8x128xf32> to vector<8x32xf32>
    %331 = vector.extract_strided_slice %328 {offsets = [0, 32], sizes = [8, 32], strides = [1, 1]} : vector<8x128xf32> to vector<8x32xf32>
    %332 = vector.extract_strided_slice %329 {offsets = [0, 64], sizes = [8, 32], strides = [1, 1]} : vector<8x128xf32> to vector<8x32xf32>
    %333 = vector.extract_strided_slice %328 {offsets = [0, 96], sizes = [8, 32], strides = [1, 1]} : vector<8x128xf32> to vector<8x32xf32>
    %334 = arith.mulf %331, %295 : vector<8x32xf32>
    %335 = arith.mulf %330, %332 : vector<8x32xf32>
    %336 = arith.addf %334, %335 : vector<8x32xf32>
    %337 = math.tanh %336 : vector<8x32xf32>
    %338 = arith.mulf %333, %337 : vector<8x32xf32>
    %c7 = arith.constant 7 : index
    %c0_60 = arith.constant 0 : index
    %c0_61 = arith.constant 0 : index
    %339 = vector.load %arg6[%c7, %c0_60, %c0_61] : memref<8x8x32xf32, #tpu.memory_space<vmem>>, vector<1x8x32xf32>
    %340 = vector.shape_cast %339 : vector<1x8x32xf32> to vector<8x32xf32>
    %341 = vector.shape_cast %338 : vector<8x32xf32> to vector<1x8x32xf32>
    tpu.vector_store %arg6[%c7, %c0_60, %c0_61], %341 {strides = array<i32>} : memref<8x8x32xf32, #tpu.memory_space<vmem>>, vector<1x8x32xf32>,
    return
  }
}

</mosaic_0001>

<llo_original>
// kernel: tpu_custom_call.1
$region0: #{tpu_custom_call.1}
  #allocation0 [shape = 'u32[]', space=smem, size = 0x4, offset = 0x4, fixed_abs, tag = 'smem constant byte address 0x4 - core index']
  #allocation1 [shape = 'u32[144,128]{1,0:T(1,128)}', space=vmem, size = 0x12000, scoped, tag = 'internal scratch']
  %s0 = inlined_call_operand.vmem [shape: f32[8,8,4], index: 0, kind: input, shape index: {}]
  %s1 = inlined_call_operand.vmem [shape: bf16[4,128], index: 1, kind: input, shape index: {}]
  %s2 = inlined_call_operand.vmem [shape: bf16[32,128], index: 2, kind: input, shape index: {}]
  %s3 = inlined_call_operand.vmem [shape: f32[1,128], index: 3, kind: input, shape index: {}]
  %s4 = inlined_call_operand.vmem [shape: bf16[64,128], index: 4, kind: input, shape index: {}]
  %s5 = inlined_call_operand.vmem [shape: f32[1,128], index: 5, kind: input, shape index: {}]
  %s6 = inlined_call_operand.hbm [shape: f32[8,8,32], index: 6, kind: output, shape index: {}]
  %s7 = sld [smem:[#allocation0]]
  $region34: #{tpu_custom_call.1} parent=0
    _
  %s9 = ssub.s32 1, %s7
  %s10 = scalar_select 0, %s9, %s7
  $region1: #{tpu_custom_call.1} parent=0
    #allocation2 [shape = 'u8[32768]{0}', space=vmem, size = 0x8000, scoped, tag = 'output window, operand 0, single buffered']
    #allocation3 [shape = 's32[1]{0}', space=sflag, size = 0x4, scoped, tag = 'scoped memory for tpu_custom_call.1']
    %11 = vsyncpa [#allocation3], 0
    // Predicated region
    $region2: #{tpu_custom_call.1} parent=1 // pred_check
      _
    $region3: #{tpu_custom_call.1} parent=1 // pred_check_branch
      %13 = sbr.rel (0) target = $region5
    $region4: #{tpu_custom_call.1} parent=1 // pred_region
      _
    $region5: #{tpu_custom_call.1} parent=1 // pred_fallthru
      _
    // Predicated region
    $region6: #{tpu_custom_call.1} parent=1 // pred_check
      _
    $region7: #{tpu_custom_call.1} parent=1 // pred_check_branch
      %15 = sbr.rel (0) target = $region9
    $region8: #{tpu_custom_call.1} parent=1 // pred_region
      _
    $region9: #{tpu_custom_call.1} parent=1 // pred_fallthru
      _
    // Predicated region
    $region10: #{tpu_custom_call.1} parent=1 // pred_check
      _
    $region11: #{tpu_custom_call.1} parent=1 // pred_check_branch
      %17 = sbr.rel (0) target = $region13
    $region12: #{tpu_custom_call.1} parent=1 // pred_region
      _
    $region13: #{tpu_custom_call.1} parent=1 // pred_fallthru
      _
    // Predicated region
    $region14: #{tpu_custom_call.1} parent=1 // pred_check
      _
    $region15: #{tpu_custom_call.1} parent=1 // pred_check_branch
      %19 = sbr.rel (0) target = $region17
    $region16: #{tpu_custom_call.1} parent=1 // pred_region
      _
    $region17: #{tpu_custom_call.1} parent=1 // pred_fallthru
      _
    // Predicated region
    $region18: #{tpu_custom_call.1} parent=1 // pred_check
      _
    $region19: #{tpu_custom_call.1} parent=1 // pred_check_branch
      %21 = sbr.rel (0) target = $region21
    $region20: #{tpu_custom_call.1} parent=1 // pred_region
      _
    $region21: #{tpu_custom_call.1} parent=1 // pred_fallthru
      _
    // Predicated region
    $region22: #{tpu_custom_call.1} parent=1 // pred_check
      _
    $region23: #{tpu_custom_call.1} parent=1 // pred_check_branch
      %23 = sbr.rel (0) target = $region25
    $region24: #{tpu_custom_call.1} parent=1 // pred_region
      _
    $region25: #{tpu_custom_call.1} parent=1 // pred_fallthru
      _
    %v25 = vld [vmem:[%s0] sm:$0xff]
    %v26 = vld [vmem:[%s0 + $0x8] sm:$0xff]
    %v27 = vld [vmem:[%s0 + $0x10] sm:$0xff]
    %v28 = vld [vmem:[%s0 + $0x18] sm:$0xff]
    %v29 = vld [vmem:[%s0 + $0x20] sm:$0xff]
    %v30 = vld [vmem:[%s0 + $0x28] sm:$0xff]
    %v31 = vld [vmem:[%s0 + $0x30] sm:$0xff]
    %v32 = vld [vmem:[%s0 + $0x38] sm:$0xff]
    %v33 = vpack.c.bf16 %v26, %v25
    %v34 = vpack.c.bf16 %v28, %v27
    %v35 = vpack.c.bf16 %v30, %v29
    %v36 = vpack.c.bf16 %v32, %v31
    %v37 = vld [vmem:[%s1] sm:$0x3]
    %v38 = vld [vmem:[%s3] sm:$0x1]
    %v40 = vlaneseq
    %v41 = vshrl.u32 %v40, 7
    %v42 = vsub.s32 0, %v41
    %v43 = vrot.slane %v38, %v42
    %vm45 = vcmask 31744
    %v47 = vsel %vm45, %v33, 0
    %v50 = vsel %vm45, %v34, 0
    %v53 = vsel %vm45, %v35, 0
    %v56 = vsel %vm45, %v36, 0
    %vm58 = vcmask 1041408
    %v60 = vsel %vm58, %v37, 0
    %62 = vmatprep.subr.bf16.mxu0 0
    %63 = vmatpush1.bf16.msra.mxu0 %v60
    %64 = vmatprep.subr.bf16.mxu0 0
    %65 = vmatpush1.bf16.msra.mxu0 0
    %66 = vmatprep.subr.bf16.mxu0 0
    %67 = vmatpush1.bf16.msra.mxu0 0
    %68 = vmatprep.subr.bf16.mxu0 0
    %69 = vmatpush1.bf16.msra.mxu0 0
    %70 = vmatprep.subr.bf16.mxu0 0
    %71 = vmatpush1.bf16.msra.mxu0 0
    %72 = vmatprep.subr.bf16.mxu0 0
    %73 = vmatpush1.bf16.msra.mxu0 0
    %74 = vmatprep.subr.bf16.mxu0 0
    %75 = vmatpush1.bf16.msra.mxu0 0
    %76 = vmatprep.subr.bf16.mxu0 0
    %77 = vmatpush1.bf16.msra.mxu0 0
    %78 = vmatprep.subr.bf16.mxu0 0
    %79 = vmatpush1.bf16.msra.mxu0 0
    %80 = vmatprep.subr.bf16.mxu0 0
    %81 = vmatpush1.bf16.msra.mxu0 0
    %82 = vmatprep.subr.bf16.mxu0 0
    %83 = vmatpush1.bf16.msra.mxu0 0
    %84 = vmatprep.subr.bf16.mxu0 0
    %85 = vmatpush1.bf16.msra.mxu0 0
    %86 = vmatprep.subr.bf16.mxu0 0
    %87 = vmatpush1.bf16.msra.mxu0 0
    %88 = vmatprep.subr.bf16.mxu0 0
    %89 = vmatpush1.bf16.msra.mxu0 0
    %90 = vmatprep.subr.bf16.mxu0 0
    %91 = vmatpush1.bf16.msra.mxu0 0
    %92 = vmatprep.subr.bf16.mxu0 0
    %93 = vmatpush1.bf16.msra.mxu0 0
    %94 = vmatprep.mubr.bf16.mxu0 0
    %95 = vmatmul.mubr.bf16.gmra.mrb[0].mxu0 %v47
    %v96 = vpop.f32.mrb[0].mxu0
    %v97 = vadd.f32 %v43, %v96
    %v98 = vpop.f32.mrb[0].mxu0
    %v99 = vpop.f32.mrb[0].mxu0
    %v100 = vadd.f32 %v43, %v99
    %v101 = vpop.f32.mrb[0].mxu0
    %102 = vmatprep.mubr.bf16.mxu0 0
    %103 = vmatmul.mubr.bf16.gmra.mrb[0].mxu0 %v50
    %v104 = vpop.f32.mrb[0].mxu0
    %v105 = vadd.f32 %v43, %v104
    %v106 = vpop.f32.mrb[0].mxu0
    %v107 = vpop.f32.mrb[0].mxu0
    %v108 = vadd.f32 %v43, %v107
    %v109 = vpop.f32.mrb[0].mxu0
    %110 = vmatprep.mubr.bf16.mxu0 0
    %111 = vmatmul.mubr.bf16.gmra.mrb[0].mxu0 %v53
    %v112 = vpop.f32.mrb[0].mxu0
    %v113 = vadd.f32 %v43, %v112
    %v114 = vpop.f32.mrb[0].mxu0
    %v115 = vpop.f32.mrb[0].mxu0
    %v116 = vadd.f32 %v43, %v115
    %v117 = vpop.f32.mrb[0].mxu0
    %118 = vmatprep.mubr.bf16.mxu0 0
    %119 = vmatmul.mubr.bf16.gmra.mrb[0].mxu0 %v56
    %v120 = vpop.f32.mrb[0].mxu0
    %v121 = vadd.f32 %v43, %v120
    %v122 = vpop.f32.mrb[0].mxu0
    %v123 = vpop.f32.mrb[0].mxu0
    %v124 = vadd.f32 %v43, %v123
    %v125 = vpop.f32.mrb[0].mxu0
    %126 = vdwg.mxu0
    %v127 = vld [vmem:[%s2] sm:$0xf]
    %v128 = vld [vmem:[%s2 + $0x4] sm:$0xf]
    %v129 = vld [vmem:[%s2 + $0x8] sm:$0xf]
    %v130 = vld [vmem:[%s2 + $0xc] sm:$0xf]
    %v131 = vld [vmem:[%s4] sm:$0xf]
    %v132 = vld [vmem:[%s4 + $0x4] sm:$0xf]
    %v133 = vld [vmem:[%s4 + $0x8] sm:$0xf]
    %v134 = vld [vmem:[%s4 + $0xc] sm:$0xf]
    %v135 = vld [vmem:[%s4 + $0x10] sm:$0xf]
    %v136 = vld [vmem:[%s4 + $0x14] sm:$0xf]
    %v137 = vld [vmem:[%s4 + $0x18] sm:$0xf]
    %v138 = vld [vmem:[%s4 + $0x1c] sm:$0xf]
    %v139 = vld [vmem:[%s5] sm:$0x1]
    %v141 = vlaneseq
    %v142 = vshrl.u32 %v141, 7
    %v143 = vsub.s32 0, %v142
    %v144 = vrot.slane %v139, %v143
    %v150 = vunpack.c.l.b16 %v127
    %v151 = vunpack.c.l.b16 %v128
    %v152 = vunpack.c.l.b16 %v129
    %v153 = vunpack.c.l.b16 %v130
    %v154 = vpack.c.b16 %v151, %v150
    %v155 = vpack.c.b16 %v153, %v152
    %vm158 = vcmask 261120
    %v160 = vsel %vm158, 0, 0
    %162 = vmatprep.subr.bf16.mxu0 0
    %163 = vmatpush1.bf16.msra.mxu0 %v154
    %164 = vmatprep.subr.bf16.mxu0 0
    %165 = vmatpush1.bf16.msra.mxu0 %v155
    %166 = vmatprep.subr.bf16.mxu0 0
    %167 = vmatpush1.bf16.msra.mxu0 0
    %168 = vmatprep.subr.bf16.mxu0 0
    %169 = vmatpush1.bf16.msra.mxu0 0
    %170 = vmatprep.subr.bf16.mxu0 0
    %171 = vmatpush1.bf16.msra.mxu0 0
    %172 = vmatprep.subr.bf16.mxu0 0
    %173 = vmatpush1.bf16.msra.mxu0 0
    %174 = vmatprep.subr.bf16.mxu0 0
    %175 = vmatpush1.bf16.msra.mxu0 0
    %176 = vmatprep.subr.bf16.mxu0 0
    %177 = vmatpush1.bf16.msra.mxu0 0
    %178 = vmatprep.subr.bf16.mxu0 0
    %179 = vmatpush1.bf16.msra.mxu0 0
    %180 = vmatprep.subr.bf16.mxu0 0
    %181 = vmatpush1.bf16.msra.mxu0 0
    %182 = vmatprep.subr.bf16.mxu0 0
    %183 = vmatpush1.bf16.msra.mxu0 0
    %184 = vmatprep.subr.bf16.mxu0 0
    %185 = vmatpush1.bf16.msra.mxu0 0
    %186 = vmatprep.subr.bf16.mxu0 0
    %187 = vmatpush1.bf16.msra.mxu0 0
    %188 = vmatprep.subr.bf16.mxu0 0
    %189 = vmatpush1.bf16.msra.mxu0 0
    %190 = vmatprep.subr.bf16.mxu0 0
    %191 = vmatpush1.bf16.msra.mxu0 0
    %192 = vmatprep.subr.bf16.mxu0 0
    %193 = vmatpush1.bf16.msra.mxu0 0
    %194 = vmatprep.mubr.bf16.mxu0 0
    %195 = vmatmul.mubr.bf16.gmra.mrb[0].mxu0 %v160
    %v196 = vpop.f32.mrb[0].mxu0
    %v197 = vadd.f32 0.0, %v196
    %v198 = vpop.f32.mrb[0].mxu0
    %v199 = vpop.f32.mrb[0].mxu0
    %v200 = vpop.f32.mrb[0].mxu0
    %201 = vdwg.mxu0
    %v202 = vadd.f32 %v97, %v197
    %v203 = vxor.u32 %v202, 2147483648
    %v204 = vmul.f32 %v203, 1.442695
    %v205 = vpow.pop %v204
    %v206 = vadd.f32 %v205, 1.0
    %v207 = vrcp.pop %v206
    %v208 = vmul.f32 1.0, %v207
    %v209 = vtanh.pop %v202
    %v210 = vmul.f32 %v208, 0.0
    %212 = vrot.lane.b32.xlu0 %v209, 64
    %v213 = vpop.permute.xlu0 %212
    %v215 = vmul.f32 %v208, %v213
    %217 = vrot.lane.b32.xlu0 %v215, 32
    %v218 = vpop.permute.xlu0 %217
    %v220 = vadd.f32 %v210, %v218
    %v221 = vtanh.pop %v220
    %223 = vrot.lane.b32.xlu0 %v221, 64
    %v224 = vpop.permute.xlu0 %223
    %v226 = vmul.f32 %v208, %v224
    %228 = vrot.lane.b32.xlu0 %v226, 32
    %v229 = vpop.permute.xlu0 %228
    %v231 = vsel %vm158, %v229, 0.0
    %v232 = vpack.c.bf16 %v231, %v231
    %v241 = vunpack.c.l.b16 %v131
    %v242 = vunpack.c.l.b16 %v132
    %v243 = vunpack.c.l.b16 %v133
    %v244 = vunpack.c.l.b16 %v134
    %v245 = vunpack.c.l.b16 %v135
    %v246 = vunpack.c.l.b16 %v136
    %v247 = vunpack.c.l.b16 %v137
    %v248 = vunpack.c.l.b16 %v138
    %v249 = vpack.c.b16 %v242, %v241
    %v250 = vpack.c.b16 %v244, %v243
    %v251 = vpack.c.b16 %v246, %v245
    %v252 = vpack.c.b16 %v248, %v247
    %vm257 = vcmask 523264
    %v259 = vsel %vm257, %v232, 0
    %261 = vmatprep.subr.bf16.mxu0 0
    %262 = vmatpush1.bf16.msra.mxu0 %v249
    %263 = vmatprep.subr.bf16.mxu0 0
    %264 = vmatpush1.bf16.msra.mxu0 %v250
    %265 = vmatprep.subr.bf16.mxu0 0
    %266 = vmatpush1.bf16.msra.mxu0 %v251
    %267 = vmatprep.subr.bf16.mxu0 0
    %268 = vmatpush1.bf16.msra.mxu0 %v252
    %269 = vmatprep.subr.bf16.mxu0 0
    %270 = vmatpush1.bf16.msra.mxu0 0
    %271 = vmatprep.subr.bf16.mxu0 0
    %272 = vmatpush1.bf16.msra.mxu0 0
    %273 = vmatprep.subr.bf16.mxu0 0
    %274 = vmatpush1.bf16.msra.mxu0 0
    %275 = vmatprep.subr.bf16.mxu0 0
    %276 = vmatpush1.bf16.msra.mxu0 0
    %277 = vmatprep.subr.bf16.mxu0 0
    %278 = vmatpush1.bf16.msra.mxu0 0
    %279 = vmatprep.subr.bf16.mxu0 0
    %280 = vmatpush1.bf16.msra.mxu0 0
    %281 = vmatprep.subr.bf16.mxu0 0
    %282 = vmatpush1.bf16.msra.mxu0 0
    %283 = vmatprep.subr.bf16.mxu0 0
    %284 = vmatpush1.bf16.msra.mxu0 0
    %285 = vmatprep.subr.bf16.mxu0 0
    %286 = vmatpush1.bf16.msra.mxu0 0
    %287 = vmatprep.subr.bf16.mxu0 0
    %288 = vmatpush1.bf16.msra.mxu0 0
    %289 = vmatprep.subr.bf16.mxu0 0
    %290 = vmatpush1.bf16.msra.mxu0 0
    %291 = vmatprep.subr.bf16.mxu0 0
    %292 = vmatpush1.bf16.msra.mxu0 0
    %293 = vmatprep.mubr.bf16.mxu0 0
    %294 = vmatmul.mubr.bf16.gmra.mrb[0].mxu0 %v259
    %v295 = vpop.f32.mrb[0].mxu0
    %v296 = vadd.f32 %v144, %v295
    %v297 = vpop.f32.mrb[0].mxu0
    %v298 = vpop.f32.mrb[0].mxu0
    %v299 = vpop.f32.mrb[0].mxu0
    %300 = vdwg.mxu0
    %v301 = vxor.u32 %v296, 2147483648
    %v302 = vmul.f32 %v301, 1.442695
    %v303 = vpow.pop %v302
    %v304 = vadd.f32 %v303, 1.0
    %v305 = vrcp.pop %v304
    %v306 = vmul.f32 1.0, %v305
    %v307 = vtanh.pop %v296
    %v308 = vmul.f32 %v306, 0.0
    %310 = vrot.lane.b32.xlu0 %v307, 64
    %v311 = vpop.permute.xlu0 %310
    %v313 = vmul.f32 %v306, %v311
    %315 = vrot.lane.b32.xlu0 %v313, 32
    %v316 = vpop.permute.xlu0 %315
    %v318 = vadd.f32 %v308, %v316
    %v319 = vtanh.pop %v318
    %321 = vrot.lane.b32.xlu0 %v319, 64
    %v322 = vpop.permute.xlu0 %321
    %v324 = vmul.f32 %v306, %v322
    %326 = vrot.lane.b32.xlu0 %v324, 32
    %v327 = vpop.permute.xlu0 %326
    %329 = vst.msk [vmem:[#allocation2] sm:$0xff] %vm158, %v327
    %v330 = vpack.c.bf16 %v226, %v226
    %332 = vrot.lane.b32.xlu0 %v330, 32
    %v333 = vpop.permute.xlu0 %332
    %v335 = vsel %vm158, %v333, 0
    %337 = vmatprep.subr.bf16.mxu0 0
    %338 = vmatpush1.bf16.msra.mxu0 %v154
    %339 = vmatprep.subr.bf16.mxu0 0
    %340 = vmatpush1.bf16.msra.mxu0 %v155
    %341 = vmatprep.subr.bf16.mxu0 0
    %342 = vmatpush1.bf16.msra.mxu0 0
    %343 = vmatprep.subr.bf16.mxu0 0
    %344 = vmatpush1.bf16.msra.mxu0 0
    %345 = vmatprep.subr.bf16.mxu0 0
    %346 = vmatpush1.bf16.msra.mxu0 0
    %347 = vmatprep.subr.bf16.mxu0 0
    %348 = vmatpush1.bf16.msra.mxu0 0
    %349 = vmatprep.subr.bf16.mxu0 0
    %350 = vmatpush1.bf16.msra.mxu0 0
    %351 = vmatprep.subr.bf16.mxu0 0
    %352 = vmatpush1.bf16.msra.mxu0 0
    %353 = vmatprep.subr.bf16.mxu0 0
    %354 = vmatpush1.bf16.msra.mxu0 0
    %355 = vmatprep.subr.bf16.mxu0 0
    %356 = vmatpush1.bf16.msra.mxu0 0
    %357 = vmatprep.subr.bf16.mxu0 0
    %358 = vmatpush1.bf16.msra.mxu0 0
    %359 = vmatprep.subr.bf16.mxu0 0
    %360 = vmatpush1.bf16.msra.mxu0 0
    %361 = vmatprep.subr.bf16.mxu0 0
    %362 = vmatpush1.bf16.msra.mxu0 0
    %363 = vmatprep.subr.bf16.mxu0 0
    %364 = vmatpush1.bf16.msra.mxu0 0
    %365 = vmatprep.subr.bf16.mxu0 0
    %366 = vmatpush1.bf16.msra.mxu0 0
    %367 = vmatprep.subr.bf16.mxu0 0
    %368 = vmatpush1.bf16.msra.mxu0 0
    %369 = vmatprep.mubr.bf16.mxu0 0
    %370 = vmatmul.mubr.bf16.gmra.mrb[0].mxu0 %v335
    %v371 = vpop.f32.mrb[0].mxu0
    %v372 = vadd.f32 0.0, %v371
    %v373 = vpop.f32.mrb[0].mxu0
    %v374 = vpop.f32.mrb[0].mxu0
    %v375 = vpop.f32.mrb[0].mxu0
    %376 = vdwg.mxu0
    %v377 = vadd.f32 %v100, %v372
    %v378 = vxor.u32 %v377, 2147483648
    %v379 = vmul.f32 %v378, 1.442695
    %v380 = vpow.pop %v379
    %v381 = vadd.f32 %v380, 1.0
    %v382 = vrcp.pop %v381
    %v383 = vmul.f32 1.0, %v382
    %v384 = vtanh.pop %v377
    %v385 = vmul.f32 %v383, %v220
    %387 = vrot.lane.b32.xlu0 %v384, 64
    %v388 = vpop.permute.xlu0 %387
    %v390 = vmul.f32 %v383, %v388
    %392 = vrot.lane.b32.xlu0 %v390, 32
    %v393 = vpop.permute.xlu0 %392
    %v395 = vadd.f32 %v385, %v393
    %v396 = vtanh.pop %v395
    %398 = vrot.lane.b32.xlu0 %v396, 64
    %v399 = vpop.permute.xlu0 %398
    %v401 = vmul.f32 %v383, %v399
    %403 = vrot.lane.b32.xlu0 %v401, 32
    %v404 = vpop.permute.xlu0 %403
    %406 = vrot.lane.b32.xlu0 %v324, 64
    %v407 = vpop.permute.xlu0 %406
    %v409 = vsel %vm158, %v404, %v407
    %v410 = vpack.c.bf16 %v409, %v409
    %v412 = vsel %vm257, %v410, 0
    %414 = vmatprep.subr.bf16.mxu0 0
    %415 = vmatpush1.bf16.msra.mxu0 %v249
    %416 = vmatprep.subr.bf16.mxu0 0
    %417 = vmatpush1.bf16.msra.mxu0 %v250
    %418 = vmatprep.subr.bf16.mxu0 0
    %419 = vmatpush1.bf16.msra.mxu0 %v251
    %420 = vmatprep.subr.bf16.mxu0 0
    %421 = vmatpush1.bf16.msra.mxu0 %v252
    %422 = vmatprep.subr.bf16.mxu0 0
    %423 = vmatpush1.bf16.msra.mxu0 0
    %424 = vmatprep.subr.bf16.mxu0 0
    %425 = vmatpush1.bf16.msra.mxu0 0
    %426 = vmatprep.subr.bf16.mxu0 0
    %427 = vmatpush1.bf16.msra.mxu0 0
    %428 = vmatprep.subr.bf16.mxu0 0
    %429 = vmatpush1.bf16.msra.mxu0 0
    %430 = vmatprep.subr.bf16.mxu0 0
    %431 = vmatpush1.bf16.msra.mxu0 0
    %432 = vmatprep.subr.bf16.mxu0 0
    %433 = vmatpush1.bf16.msra.mxu0 0
    %434 = vmatprep.subr.bf16.mxu0 0
    %435 = vmatpush1.bf16.msra.mxu0 0
    %436 = vmatprep.subr.bf16.mxu0 0
    %437 = vmatpush1.bf16.msra.mxu0 0
    %438 = vmatprep.subr.bf16.mxu0 0
    %439 = vmatpush1.bf16.msra.mxu0 0
    %440 = vmatprep.subr.bf16.mxu0 0
    %441 = vmatpush1.bf16.msra.mxu0 0
    %442 = vmatprep.subr.bf16.mxu0 0
    %443 = vmatpush1.bf16.msra.mxu0 0
    %444 = vmatprep.subr.bf16.mxu0 0
    %445 = vmatpush1.bf16.msra.mxu0 0
    %446 = vmatprep.mubr.bf16.mxu0 0
    %447 = vmatmul.mubr.bf16.gmra.mrb[0].mxu0 %v412
    %v448 = vpop.f32.mrb[0].mxu0
    %v449 = vadd.f32 %v144, %v448
    %v450 = vpop.f32.mrb[0].mxu0
    %v451 = vpop.f32.mrb[0].mxu0
    %v452 = vpop.f32.mrb[0].mxu0
    %453 = vdwg.mxu0
    %v454 = vxor.u32 %v449, 2147483648
    %v455 = vmul.f32 %v454, 1.442695
    %v456 = vpow.pop %v455
    %v457 = vadd.f32 %v456, 1.0
    %v458 = vrcp.pop %v457
    %v459 = vmul.f32 1.0, %v458
    %v460 = vtanh.pop %v449
    %v461 = vmul.f32 %v459, %v318
    %463 = vrot.lane.b32.xlu0 %v460, 64
    %v464 = vpop.permute.xlu0 %463
    %v466 = vmul.f32 %v459, %v464
    %468 = vrot.lane.b32.xlu0 %v466, 32
    %v469 = vpop.permute.xlu0 %468
    %v471 = vadd.f32 %v461, %v469
    %v472 = vtanh.pop %v471
    %474 = vrot.lane.b32.xlu0 %v472, 64
    %v475 = vpop.permute.xlu0 %474
    %v477 = vmul.f32 %v459, %v475
    %479 = vrot.lane.b32.xlu0 %v477, 32
    %v480 = vpop.permute.xlu0 %479
    %s482 = scalar_lea.vmem [#allocation2], 8
    %483 = vst.msk [vmem:[%s482] sm:$0xff] %vm158, %v480
    %v484 = vpack.c.bf16 %v401, %v401
    %486 = vrot.lane.b32.xlu0 %v484, 32
    %v487 = vpop.permute.xlu0 %486
    %v489 = vsel %vm158, %v487, 0
    %491 = vmatprep.subr.bf16.mxu0 0
    %492 = vmatpush1.bf16.msra.mxu0 %v154
    %493 = vmatprep.subr.bf16.mxu0 0
    %494 = vmatpush1.bf16.msra.mxu0 %v155
    %495 = vmatprep.subr.bf16.mxu0 0
    %496 = vmatpush1.bf16.msra.mxu0 0
    %497 = vmatprep.subr.bf16.mxu0 0
    %498 = vmatpush1.bf16.msra.mxu0 0
    %499 = vmatprep.subr.bf16.mxu0 0
    %500 = vmatpush1.bf16.msra.mxu0 0
    %501 = vmatprep.subr.bf16.mxu0 0
    %502 = vmatpush1.bf16.msra.mxu0 0
    %503 = vmatprep.subr.bf16.mxu0 0
    %504 = vmatpush1.bf16.msra.mxu0 0
    %505 = vmatprep.subr.bf16.mxu0 0
    %506 = vmatpush1.bf16.msra.mxu0 0
    %507 = vmatprep.subr.bf16.mxu0 0
    %508 = vmatpush1.bf16.msra.mxu0 0
    %509 = vmatprep.subr.bf16.mxu0 0
    %510 = vmatpush1.bf16.msra.mxu0 0
    %511 = vmatprep.subr.bf16.mxu0 0
    %512 = vmatpush1.bf16.msra.mxu0 0
    %513 = vmatprep.subr.bf16.mxu0 0
    %514 = vmatpush1.bf16.msra.mxu0 0
    %515 = vmatprep.subr.bf16.mxu0 0
    %516 = vmatpush1.bf16.msra.mxu0 0
    %517 = vmatprep.subr.bf16.mxu0 0
    %518 = vmatpush1.bf16.msra.mxu0 0
    %519 = vmatprep.subr.bf16.mxu0 0
    %520 = vmatpush1.bf16.msra.mxu0 0
    %521 = vmatprep.subr.bf16.mxu0 0
    %522 = vmatpush1.bf16.msra.mxu0 0
    %523 = vmatprep.mubr.bf16.mxu0 0
    %524 = vmatmul.mubr.bf16.gmra.mrb[0].mxu0 %v489
    %v525 = vpop.f32.mrb[0].mxu0
    %v526 = vadd.f32 0.0, %v525
    %v527 = vpop.f32.mrb[0].mxu0
    %v528 = vpop.f32.mrb[0].mxu0
    %v529 = vpop.f32.mrb[0].mxu0
    %530 = vdwg.mxu0
    %v531 = vadd.f32 %v105, %v526
    %v532 = vxor.u32 %v531, 2147483648
    %v533 = vmul.f32 %v532, 1.442695
    %v534 = vpow.pop %v533
    %v535 = vadd.f32 %v534, 1.0
    %v536 = vrcp.pop %v535
    %v537 = vmul.f32 1.0, %v536
    %v538 = vtanh.pop %v531
    %v539 = vmul.f32 %v537, %v395
    %541 = vrot.lane.b32.xlu0 %v538, 64
    %v542 = vpop.permute.xlu0 %541
    %v544 = vmul.f32 %v537, %v542
    %546 = vrot.lane.b32.xlu0 %v544, 32
    %v547 = vpop.permute.xlu0 %546
    %v549 = vadd.f32 %v539, %v547
    %v550 = vtanh.pop %v549
    %552 = vrot.lane.b32.xlu0 %v550, 64
    %v553 = vpop.permute.xlu0 %552
    %v555 = vmul.f32 %v537, %v553
    %557 = vrot.lane.b32.xlu0 %v555, 32
    %v558 = vpop.permute.xlu0 %557
    %560 = vrot.lane.b32.xlu0 %v477, 64
    %v561 = vpop.permute.xlu0 %560
    %v563 = vsel %vm158, %v558, %v561
    %v564 = vpack.c.bf16 %v563, %v563
    %v566 = vsel %vm257, %v564, 0
    %568 = vmatprep.subr.bf16.mxu0 0
    %569 = vmatpush1.bf16.msra.mxu0 %v249
    %570 = vmatprep.subr.bf16.mxu0 0
    %571 = vmatpush1.bf16.msra.mxu0 %v250
    %572 = vmatprep.subr.bf16.mxu0 0
    %573 = vmatpush1.bf16.msra.mxu0 %v251
    %574 = vmatprep.subr.bf16.mxu0 0
    %575 = vmatpush1.bf16.msra.mxu0 %v252
    %576 = vmatprep.subr.bf16.mxu0 0
    %577 = vmatpush1.bf16.msra.mxu0 0
    %578 = vmatprep.subr.bf16.mxu0 0
    %579 = vmatpush1.bf16.msra.mxu0 0
    %580 = vmatprep.subr.bf16.mxu0 0
    %581 = vmatpush1.bf16.msra.mxu0 0
    %582 = vmatprep.subr.bf16.mxu0 0
    %583 = vmatpush1.bf16.msra.mxu0 0
    %584 = vmatprep.subr.bf16.mxu0 0
    %585 = vmatpush1.bf16.msra.mxu0 0
    %586 = vmatprep.subr.bf16.mxu0 0
    %587 = vmatpush1.bf16.msra.mxu0 0
    %588 = vmatprep.subr.bf16.mxu0 0
    %589 = vmatpush1.bf16.msra.mxu0 0
    %590 = vmatprep.subr.bf16.mxu0 0
    %591 = vmatpush1.bf16.msra.mxu0 0
    %592 = vmatprep.subr.bf16.mxu0 0
    %593 = vmatpush1.bf16.msra.mxu0 0
    %594 = vmatprep.subr.bf16.mxu0 0
    %595 = vmatpush1.bf16.msra.mxu0 0
    %596 = vmatprep.subr.bf16.mxu0 0
    %597 = vmatpush1.bf16.msra.mxu0 0
    %598 = vmatprep.subr.bf16.mxu0 0
    %599 = vmatpush1.bf16.msra.mxu0 0
    %600 = vmatprep.mubr.bf16.mxu0 0
    %601 = vmatmul.mubr.bf16.gmra.mrb[0].mxu0 %v566
    %v602 = vpop.f32.mrb[0].mxu0
    %v603 = vadd.f32 %v144, %v602
    %v604 = vpop.f32.mrb[0].mxu0
    %v605 = vpop.f32.mrb[0].mxu0
    %v606 = vpop.f32.mrb[0].mxu0
    %607 = vdwg.mxu0
    %v608 = vxor.u32 %v603, 2147483648
    %v609 = vmul.f32 %v608, 1.442695
    %v610 = vpow.pop %v609
    %v611 = vadd.f32 %v610, 1.0
    %v612 = vrcp.pop %v611
    %v613 = vmul.f32 1.0, %v612
    %v614 = vtanh.pop %v603
    %v615 = vmul.f32 %v613, %v471
    %617 = vrot.lane.b32.xlu0 %v614, 64
    %v618 = vpop.permute.xlu0 %617
    %v620 = vmul.f32 %v613, %v618
    %622 = vrot.lane.b32.xlu0 %v620, 32
    %v623 = vpop.permute.xlu0 %622
    %v625 = vadd.f32 %v615, %v623
    %v626 = vtanh.pop %v625
    %628 = vrot.lane.b32.xlu0 %v626, 64
    %v629 = vpop.permute.xlu0 %628
    %v631 = vmul.f32 %v613, %v629
    %633 = vrot.lane.b32.xlu0 %v631, 32
    %v634 = vpop.permute.xlu0 %633
    %s636 = scalar_lea.vmem [#allocation2], 16
    %637 = vst.msk [vmem:[%s636] sm:$0xff] %vm158, %v634
    %v638 = vpack.c.bf16 %v555, %v555
    %640 = vrot.lane.b32.xlu0 %v638, 32
    %v641 = vpop.permute.xlu0 %640
    %v643 = vsel %vm158, %v641, 0
    %645 = vmatprep.subr.bf16.mxu0 0
    %646 = vmatpush1.bf16.msra.mxu0 %v154
    %647 = vmatprep.subr.bf16.mxu0 0
    %648 = vmatpush1.bf16.msra.mxu0 %v155
    %649 = vmatprep.subr.bf16.mxu0 0
    %650 = vmatpush1.bf16.msra.mxu0 0
    %651 = vmatprep.subr.bf16.mxu0 0
    %652 = vmatpush1.bf16.msra.mxu0 0
    %653 = vmatprep.subr.bf16.mxu0 0
    %654 = vmatpush1.bf16.msra.mxu0 0
    %655 = vmatprep.subr.bf16.mxu0 0
    %656 = vmatpush1.bf16.msra.mxu0 0
    %657 = vmatprep.subr.bf16.mxu0 0
    %658 = vmatpush1.bf16.msra.mxu0 0
    %659 = vmatprep.subr.bf16.mxu0 0
    %660 = vmatpush1.bf16.msra.mxu0 0
    %661 = vmatprep.subr.bf16.mxu0 0
    %662 = vmatpush1.bf16.msra.mxu0 0
    %663 = vmatprep.subr.bf16.mxu0 0
    %664 = vmatpush1.bf16.msra.mxu0 0
    %665 = vmatprep.subr.bf16.mxu0 0
    %666 = vmatpush1.bf16.msra.mxu0 0
    %667 = vmatprep.subr.bf16.mxu0 0
    %668 = vmatpush1.bf16.msra.mxu0 0
    %669 = vmatprep.subr.bf16.mxu0 0
    %670 = vmatpush1.bf16.msra.mxu0 0
    %671 = vmatprep.subr.bf16.mxu0 0
    %672 = vmatpush1.bf16.msra.mxu0 0
    %673 = vmatprep.subr.bf16.mxu0 0
    %674 = vmatpush1.bf16.msra.mxu0 0
    %675 = vmatprep.subr.bf16.mxu0 0
    %676 = vmatpush1.bf16.msra.mxu0 0
    %677 = vmatprep.mubr.bf16.mxu0 0
    %678 = vmatmul.mubr.bf16.gmra.mrb[0].mxu0 %v643
    %v679 = vpop.f32.mrb[0].mxu0
    %v680 = vadd.f32 0.0, %v679
    %v681 = vpop.f32.mrb[0].mxu0
    %v682 = vpop.f32.mrb[0].mxu0
    %v683 = vpop.f32.mrb[0].mxu0
    %684 = vdwg.mxu0
    %v685 = vadd.f32 %v108, %v680
    %v686 = vxor.u32 %v685, 2147483648
    %v687 = vmul.f32 %v686, 1.442695
    %v688 = vpow.pop %v687
    %v689 = vadd.f32 %v688, 1.0
    %v690 = vrcp.pop %v689
    %v691 = vmul.f32 1.0, %v690
    %v692 = vtanh.pop %v685
    %v693 = vmul.f32 %v691, %v549
    %695 = vrot.lane.b32.xlu0 %v692, 64
    %v696 = vpop.permute.xlu0 %695
    %v698 = vmul.f32 %v691, %v696
    %700 = vrot.lane.b32.xlu0 %v698, 32
    %v701 = vpop.permute.xlu0 %700
    %v703 = vadd.f32 %v693, %v701
    %v704 = vtanh.pop %v703
    %706 = vrot.lane.b32.xlu0 %v704, 64
    %v707 = vpop.permute.xlu0 %706
    %v709 = vmul.f32 %v691, %v707
    %711 = vrot.lane.b32.xlu0 %v709, 32
    %v712 = vpop.permute.xlu0 %711
    %714 = vrot.lane.b32.xlu0 %v631, 64
    %v715 = vpop.permute.xlu0 %714
    %v717 = vsel %vm158, %v712, %v715
    %v718 = vpack.c.bf16 %v717, %v717
    %v720 = vsel %vm257, %v718, 0
    %722 = vmatprep.subr.bf16.mxu0 0
    %723 = vmatpush1.bf16.msra.mxu0 %v249
    %724 = vmatprep.subr.bf16.mxu0 0
    %725 = vmatpush1.bf16.msra.mxu0 %v250
    %726 = vmatprep.subr.bf16.mxu0 0
    %727 = vmatpush1.bf16.msra.mxu0 %v251
    %728 = vmatprep.subr.bf16.mxu0 0
    %729 = vmatpush1.bf16.msra.mxu0 %v252
    %730 = vmatprep.subr.bf16.mxu0 0
    %731 = vmatpush1.bf16.msra.mxu0 0
    %732 = vmatprep.subr.bf16.mxu0 0
    %733 = vmatpush1.bf16.msra.mxu0 0
    %734 = vmatprep.subr.bf16.mxu0 0
    %735 = vmatpush1.bf16.msra.mxu0 0
    %736 = vmatprep.subr.bf16.mxu0 0
    %737 = vmatpush1.bf16.msra.mxu0 0
    %738 = vmatprep.subr.bf16.mxu0 0
    %739 = vmatpush1.bf16.msra.mxu0 0
    %740 = vmatprep.subr.bf16.mxu0 0
    %741 = vmatpush1.bf16.msra.mxu0 0
    %742 = vmatprep.subr.bf16.mxu0 0
    %743 = vmatpush1.bf16.msra.mxu0 0
    %744 = vmatprep.subr.bf16.mxu0 0
    %745 = vmatpush1.bf16.msra.mxu0 0
    %746 = vmatprep.subr.bf16.mxu0 0
    %747 = vmatpush1.bf16.msra.mxu0 0
    %748 = vmatprep.subr.bf16.mxu0 0
    %749 = vmatpush1.bf16.msra.mxu0 0
    %750 = vmatprep.subr.bf16.mxu0 0
    %751 = vmatpush1.bf16.msra.mxu0 0
    %752 = vmatprep.subr.bf16.mxu0 0
    %753 = vmatpush1.bf16.msra.mxu0 0
    %754 = vmatprep.mubr.bf16.mxu0 0
    %755 = vmatmul.mubr.bf16.gmra.mrb[0].mxu0 %v720
    %v756 = vpop.f32.mrb[0].mxu0
    %v757 = vadd.f32 %v144, %v756
    %v758 = vpop.f32.mrb[0].mxu0
    %v759 = vpop.f32.mrb[0].mxu0
    %v760 = vpop.f32.mrb[0].mxu0
    %761 = vdwg.mxu0
    %v762 = vxor.u32 %v757, 2147483648
    %v763 = vmul.f32 %v762, 1.442695
    %v764 = vpow.pop %v763
    %v765 = vadd.f32 %v764, 1.0
    %v766 = vrcp.pop %v765
    %v767 = vmul.f32 1.0, %v766
    %v768 = vtanh.pop %v757
    %v769 = vmul.f32 %v767, %v625
    %771 = vrot.lane.b32.xlu0 %v768, 64
    %v772 = vpop.permute.xlu0 %771
    %v774 = vmul.f32 %v767, %v772
    %776 = vrot.lane.b32.xlu0 %v774, 32
    %v777 = vpop.permute.xlu0 %776
    %v779 = vadd.f32 %v769, %v777
    %v780 = vtanh.pop %v779
    %782 = vrot.lane.b32.xlu0 %v780, 64
    %v783 = vpop.permute.xlu0 %782
    %v785 = vmul.f32 %v767, %v783
    %787 = vrot.lane.b32.xlu0 %v785, 32
    %v788 = vpop.permute.xlu0 %787
    %s790 = scalar_lea.vmem [#allocation2], 24
    %791 = vst.msk [vmem:[%s790] sm:$0xff] %vm158, %v788
    %v792 = vpack.c.bf16 %v709, %v709
    %794 = vrot.lane.b32.xlu0 %v792, 32
    %v795 = vpop.permute.xlu0 %794
    %v797 = vsel %vm158, %v795, 0
    %799 = vmatprep.subr.bf16.mxu0 0
    %800 = vmatpush1.bf16.msra.mxu0 %v154
    %801 = vmatprep.subr.bf16.mxu0 0
    %802 = vmatpush1.bf16.msra.mxu0 %v155
    %803 = vmatprep.subr.bf16.mxu0 0
    %804 = vmatpush1.bf16.msra.mxu0 0
    %805 = vmatprep.subr.bf16.mxu0 0
    %806 = vmatpush1.bf16.msra.mxu0 0
    %807 = vmatprep.subr.bf16.mxu0 0
    %808 = vmatpush1.bf16.msra.mxu0 0
    %809 = vmatprep.subr.bf16.mxu0 0
    %810 = vmatpush1.bf16.msra.mxu0 0
    %811 = vmatprep.subr.bf16.mxu0 0
    %812 = vmatpush1.bf16.msra.mxu0 0
    %813 = vmatprep.subr.bf16.mxu0 0
    %814 = vmatpush1.bf16.msra.mxu0 0
    %815 = vmatprep.subr.bf16.mxu0 0
    %816 = vmatpush1.bf16.msra.mxu0 0
    %817 = vmatprep.subr.bf16.mxu0 0
    %818 = vmatpush1.bf16.msra.mxu0 0
    %819 = vmatprep.subr.bf16.mxu0 0
    %820 = vmatpush1.bf16.msra.mxu0 0
    %821 = vmatprep.subr.bf16.mxu0 0
    %822 = vmatpush1.bf16.msra.mxu0 0
    %823 = vmatprep.subr.bf16.mxu0 0
    %824 = vmatpush1.bf16.msra.mxu0 0
    %825 = vmatprep.subr.bf16.mxu0 0
    %826 = vmatpush1.bf16.msra.mxu0 0
    %827 = vmatprep.subr.bf16.mxu0 0
    %828 = vmatpush1.bf16.msra.mxu0 0
    %829 = vmatprep.subr.bf16.mxu0 0
    %830 = vmatpush1.bf16.msra.mxu0 0
    %831 = vmatprep.mubr.bf16.mxu0 0
    %832 = vmatmul.mubr.bf16.gmra.mrb[0].mxu0 %v797
    %v833 = vpop.f32.mrb[0].mxu0
    %v834 = vadd.f32 0.0, %v833
    %v835 = vpop.f32.mrb[0].mxu0
    %v836 = vpop.f32.mrb[0].mxu0
    %v837 = vpop.f32.mrb[0].mxu0
    %838 = vdwg.mxu0
    %v839 = vadd.f32 %v113, %v834
    %v840 = vxor.u32 %v839, 2147483648
    %v841 = vmul.f32 %v840, 1.442695
    %v842 = vpow.pop %v841
    %v843 = vadd.f32 %v842, 1.0
    %v844 = vrcp.pop %v843
    %v845 = vmul.f32 1.0, %v844
    %v846 = vtanh.pop %v839
    %v847 = vmul.f32 %v845, %v703
    %849 = vrot.lane.b32.xlu0 %v846, 64
    %v850 = vpop.permute.xlu0 %849
    %v852 = vmul.f32 %v845, %v850
    %854 = vrot.lane.b32.xlu0 %v852, 32
    %v855 = vpop.permute.xlu0 %854
    %v857 = vadd.f32 %v847, %v855
    %v858 = vtanh.pop %v857
    %860 = vrot.lane.b32.xlu0 %v858, 64
    %v861 = vpop.permute.xlu0 %860
    %v863 = vmul.f32 %v845, %v861
    %865 = vrot.lane.b32.xlu0 %v863, 32
    %v866 = vpop.permute.xlu0 %865
    %868 = vrot.lane.b32.xlu0 %v785, 64
    %v869 = vpop.permute.xlu0 %868
    %v871 = vsel %vm158, %v866, %v869
    %v872 = vpack.c.bf16 %v871, %v871
    %v874 = vsel %vm257, %v872, 0
    %876 = vmatprep.subr.bf16.mxu0 0
    %877 = vmatpush1.bf16.msra.mxu0 %v249
    %878 = vmatprep.subr.bf16.mxu0 0
    %879 = vmatpush1.bf16.msra.mxu0 %v250
    %880 = vmatprep.subr.bf16.mxu0 0
    %881 = vmatpush1.bf16.msra.mxu0 %v251
    %882 = vmatprep.subr.bf16.mxu0 0
    %883 = vmatpush1.bf16.msra.mxu0 %v252
    %884 = vmatprep.subr.bf16.mxu0 0
    %885 = vmatpush1.bf16.msra.mxu0 0
    %886 = vmatprep.subr.bf16.mxu0 0
    %887 = vmatpush1.bf16.msra.mxu0 0
    %888 = vmatprep.subr.bf16.mxu0 0
    %889 = vmatpush1.bf16.msra.mxu0 0
    %890 = vmatprep.subr.bf16.mxu0 0
    %891 = vmatpush1.bf16.msra.mxu0 0
    %892 = vmatprep.subr.bf16.mxu0 0
    %893 = vmatpush1.bf16.msra.mxu0 0
    %894 = vmatprep.subr.bf16.mxu0 0
    %895 = vmatpush1.bf16.msra.mxu0 0
    %896 = vmatprep.subr.bf16.mxu0 0
    %897 = vmatpush1.bf16.msra.mxu0 0
    %898 = vmatprep.subr.bf16.mxu0 0
    %899 = vmatpush1.bf16.msra.mxu0 0
    %900 = vmatprep.subr.bf16.mxu0 0
    %901 = vmatpush1.bf16.msra.mxu0 0
    %902 = vmatprep.subr.bf16.mxu0 0
    %903 = vmatpush1.bf16.msra.mxu0 0
    %904 = vmatprep.subr.bf16.mxu0 0
    %905 = vmatpush1.bf16.msra.mxu0 0
    %906 = vmatprep.subr.bf16.mxu0 0
    %907 = vmatpush1.bf16.msra.mxu0 0
    %908 = vmatprep.mubr.bf16.mxu0 0
    %909 = vmatmul.mubr.bf16.gmra.mrb[0].mxu0 %v874
    %v910 = vpop.f32.mrb[0].mxu0
    %v911 = vadd.f32 %v144, %v910
    %v912 = vpop.f32.mrb[0].mxu0
    %v913 = vpop.f32.mrb[0].mxu0
    %v914 = vpop.f32.mrb[0].mxu0
    %915 = vdwg.mxu0
    %v916 = vxor.u32 %v911, 2147483648
    %v917 = vmul.f32 %v916, 1.442695
    %v918 = vpow.pop %v917
    %v919 = vadd.f32 %v918, 1.0
    %v920 = vrcp.pop %v919
    %v921 = vmul.f32 1.0, %v920
    %v922 = vtanh.pop %v911
    %v923 = vmul.f32 %v921, %v779
    %925 = vrot.lane.b32.xlu0 %v922, 64
    %v926 = vpop.permute.xlu0 %925
    %v928 = vmul.f32 %v921, %v926
    %930 = vrot.lane.b32.xlu0 %v928, 32
    %v931 = vpop.permute.xlu0 %930
    %v933 = vadd.f32 %v923, %v931
    %v934 = vtanh.pop %v933
    %936 = vrot.lane.b32.xlu0 %v934, 64
    %v937 = vpop.permute.xlu0 %936
    %v939 = vmul.f32 %v921, %v937
    %941 = vrot.lane.b32.xlu0 %v939, 32
    %v942 = vpop.permute.xlu0 %941
    %s944 = scalar_lea.vmem [#allocation2], 32
    %945 = vst.msk [vmem:[%s944] sm:$0xff] %vm158, %v942
    %v946 = vpack.c.bf16 %v863, %v863
    %948 = vrot.lane.b32.xlu0 %v946, 32
    %v949 = vpop.permute.xlu0 %948
    %v951 = vsel %vm158, %v949, 0
    %953 = vmatprep.subr.bf16.mxu0 0
    %954 = vmatpush1.bf16.msra.mxu0 %v154
    %955 = vmatprep.subr.bf16.mxu0 0
    %956 = vmatpush1.bf16.msra.mxu0 %v155
    %957 = vmatprep.subr.bf16.mxu0 0
    %958 = vmatpush1.bf16.msra.mxu0 0
    %959 = vmatprep.subr.bf16.mxu0 0
    %960 = vmatpush1.bf16.msra.mxu0 0
    %961 = vmatprep.subr.bf16.mxu0 0
    %962 = vmatpush1.bf16.msra.mxu0 0
    %963 = vmatprep.subr.bf16.mxu0 0
    %964 = vmatpush1.bf16.msra.mxu0 0
    %965 = vmatprep.subr.bf16.mxu0 0
    %966 = vmatpush1.bf16.msra.mxu0 0
    %967 = vmatprep.subr.bf16.mxu0 0
    %968 = vmatpush1.bf16.msra.mxu0 0
    %969 = vmatprep.subr.bf16.mxu0 0
    %970 = vmatpush1.bf16.msra.mxu0 0
    %971 = vmatprep.subr.bf16.mxu0 0
    %972 = vmatpush1.bf16.msra.mxu0 0
    %973 = vmatprep.subr.bf16.mxu0 0
    %974 = vmatpush1.bf16.msra.mxu0 0
    %975 = vmatprep.subr.bf16.mxu0 0
    %976 = vmatpush1.bf16.msra.mxu0 0
    %977 = vmatprep.subr.bf16.mxu0 0
    %978 = vmatpush1.bf16.msra.mxu0 0
    %979 = vmatprep.subr.bf16.mxu0 0
    %980 = vmatpush1.bf16.msra.mxu0 0
    %981 = vmatprep.subr.bf16.mxu0 0
    %982 = vmatpush1.bf16.msra.mxu0 0
    %983 = vmatprep.subr.bf16.mxu0 0
    %984 = vmatpush1.bf16.msra.mxu0 0
    %985 = vmatprep.mubr.bf16.mxu0 0
    %986 = vmatmul.mubr.bf16.gmra.mrb[0].mxu0 %v951
    %v987 = vpop.f32.mrb[0].mxu0
    %v988 = vadd.f32 0.0, %v987
    %v989 = vpop.f32.mrb[0].mxu0
    %v990 = vpop.f32.mrb[0].mxu0
    %v991 = vpop.f32.mrb[0].mxu0
    %992 = vdwg.mxu0
    %v993 = vadd.f32 %v116, %v988
    %v994 = vxor.u32 %v993, 2147483648
    %v995 = vmul.f32 %v994, 1.442695
    %v996 = vpow.pop %v995
    %v997 = vadd.f32 %v996, 1.0
    %v998 = vrcp.pop %v997
    %v999 = vmul.f32 1.0, %v998
    %v1000 = vtanh.pop %v993
    %v1001 = vmul.f32 %v999, %v857
    %1003 = vrot.lane.b32.xlu0 %v1000, 64
    %v1004 = vpop.permute.xlu0 %1003
    %v1006 = vmul.f32 %v999, %v1004
    %1008 = vrot.lane.b32.xlu0 %v1006, 32
    %v1009 = vpop.permute.xlu0 %1008
    %v1011 = vadd.f32 %v1001, %v1009
    %v1012 = vtanh.pop %v1011
    %1014 = vrot.lane.b32.xlu0 %v1012, 64
    %v1015 = vpop.permute.xlu0 %1014
    %v1017 = vmul.f32 %v999, %v1015
    %1019 = vrot.lane.b32.xlu0 %v1017, 32
    %v1020 = vpop.permute.xlu0 %1019
    %1022 = vrot.lane.b32.xlu0 %v939, 64
    %v1023 = vpop.permute.xlu0 %1022
    %v1025 = vsel %vm158, %v1020, %v1023
    %v1026 = vpack.c.bf16 %v1025, %v1025
    %v1028 = vsel %vm257, %v1026, 0
    %1030 = vmatprep.subr.bf16.mxu0 0
    %1031 = vmatpush1.bf16.msra.mxu0 %v249
    %1032 = vmatprep.subr.bf16.mxu0 0
    %1033 = vmatpush1.bf16.msra.mxu0 %v250
    %1034 = vmatprep.subr.bf16.mxu0 0
    %1035 = vmatpush1.bf16.msra.mxu0 %v251
    %1036 = vmatprep.subr.bf16.mxu0 0
    %1037 = vmatpush1.bf16.msra.mxu0 %v252
    %1038 = vmatprep.subr.bf16.mxu0 0
    %1039 = vmatpush1.bf16.msra.mxu0 0
    %1040 = vmatprep.subr.bf16.mxu0 0
    %1041 = vmatpush1.bf16.msra.mxu0 0
    %1042 = vmatprep.subr.bf16.mxu0 0
    %1043 = vmatpush1.bf16.msra.mxu0 0
    %1044 = vmatprep.subr.bf16.mxu0 0
    %1045 = vmatpush1.bf16.msra.mxu0 0
    %1046 = vmatprep.subr.bf16.mxu0 0
    %1047 = vmatpush1.bf16.msra.mxu0 0
    %1048 = vmatprep.subr.bf16.mxu0 0
    %1049 = vmatpush1.bf16.msra.mxu0 0
    %1050 = vmatprep.subr.bf16.mxu0 0
    %1051 = vmatpush1.bf16.msra.mxu0 0
    %1052 = vmatprep.subr.bf16.mxu0 0
    %1053 = vmatpush1.bf16.msra.mxu0 0
    %1054 = vmatprep.subr.bf16.mxu0 0
    %1055 = vmatpush1.bf16.msra.mxu0 0
    %1056 = vmatprep.subr.bf16.mxu0 0
    %1057 = vmatpush1.bf16.msra.mxu0 0
    %1058 = vmatprep.subr.bf16.mxu0 0
    %1059 = vmatpush1.bf16.msra.mxu0 0
    %1060 = vmatprep.subr.bf16.mxu0 0
    %1061 = vmatpush1.bf16.msra.mxu0 0
    %1062 = vmatprep.mubr.bf16.mxu0 0
    %1063 = vmatmul.mubr.bf16.gmra.mrb[0].mxu0 %v1028
    %v1064 = vpop.f32.mrb[0].mxu0
    %v1065 = vadd.f32 %v144, %v1064
    %v1066 = vpop.f32.mrb[0].mxu0
    %v1067 = vpop.f32.mrb[0].mxu0
    %v1068 = vpop.f32.mrb[0].mxu0
    %1069 = vdwg.mxu0
    %v1070 = vxor.u32 %v1065, 2147483648
    %v1071 = vmul.f32 %v1070, 1.442695
    %v1072 = vpow.pop %v1071
    %v1073 = vadd.f32 %v1072, 1.0
    %v1074 = vrcp.pop %v1073
    %v1075 = vmul.f32 1.0, %v1074
    %v1076 = vtanh.pop %v1065
    %v1077 = vmul.f32 %v1075, %v933
    %1079 = vrot.lane.b32.xlu0 %v1076, 64
    %v1080 = vpop.permute.xlu0 %1079
    %v1082 = vmul.f32 %v1075, %v1080
    %1084 = vrot.lane.b32.xlu0 %v1082, 32
    %v1085 = vpop.permute.xlu0 %1084
    %v1087 = vadd.f32 %v1077, %v1085
    %v1088 = vtanh.pop %v1087
    %1090 = vrot.lane.b32.xlu0 %v1088, 64
    %v1091 = vpop.permute.xlu0 %1090
    %v1093 = vmul.f32 %v1075, %v1091
    %1095 = vrot.lane.b32.xlu0 %v1093, 32
    %v1096 = vpop.permute.xlu0 %1095
    %s1098 = scalar_lea.vmem [#allocation2], 40
    %1099 = vst.msk [vmem:[%s1098] sm:$0xff] %vm158, %v1096
    %v1100 = vpack.c.bf16 %v1017, %v1017
    %1102 = vrot.lane.b32.xlu0 %v1100, 32
    %v1103 = vpop.permute.xlu0 %1102
    %v1105 = vsel %vm158, %v1103, 0
    %1107 = vmatprep.subr.bf16.mxu0 0
    %1108 = vmatpush1.bf16.msra.mxu0 %v154
    %1109 = vmatprep.subr.bf16.mxu0 0
    %1110 = vmatpush1.bf16.msra.mxu0 %v155
    %1111 = vmatprep.subr.bf16.mxu0 0
    %1112 = vmatpush1.bf16.msra.mxu0 0
    %1113 = vmatprep.subr.bf16.mxu0 0
    %1114 = vmatpush1.bf16.msra.mxu0 0
    %1115 = vmatprep.subr.bf16.mxu0 0
    %1116 = vmatpush1.bf16.msra.mxu0 0
    %1117 = vmatprep.subr.bf16.mxu0 0
    %1118 = vmatpush1.bf16.msra.mxu0 0
    %1119 = vmatprep.subr.bf16.mxu0 0
    %1120 = vmatpush1.bf16.msra.mxu0 0
    %1121 = vmatprep.subr.bf16.mxu0 0
    %1122 = vmatpush1.bf16.msra.mxu0 0
    %1123 = vmatprep.subr.bf16.mxu0 0
    %1124 = vmatpush1.bf16.msra.mxu0 0
    %1125 = vmatprep.subr.bf16.mxu0 0
    %1126 = vmatpush1.bf16.msra.mxu0 0
    %1127 = vmatprep.subr.bf16.mxu0 0
    %1128 = vmatpush1.bf16.msra.mxu0 0
    %1129 = vmatprep.subr.bf16.mxu0 0
    %1130 = vmatpush1.bf16.msra.mxu0 0
    %1131 = vmatprep.subr.bf16.mxu0 0
    %1132 = vmatpush1.bf16.msra.mxu0 0
    %1133 = vmatprep.subr.bf16.mxu0 0
    %1134 = vmatpush1.bf16.msra.mxu0 0
    %1135 = vmatprep.subr.bf16.mxu0 0
    %1136 = vmatpush1.bf16.msra.mxu0 0
    %1137 = vmatprep.subr.bf16.mxu0 0
    %1138 = vmatpush1.bf16.msra.mxu0 0
    %1139 = vmatprep.mubr.bf16.mxu0 0
    %1140 = vmatmul.mubr.bf16.gmra.mrb[0].mxu0 %v1105
    %v1141 = vpop.f32.mrb[0].mxu0
    %v1142 = vadd.f32 0.0, %v1141
    %v1143 = vpop.f32.mrb[0].mxu0
    %v1144 = vpop.f32.mrb[0].mxu0
    %v1145 = vpop.f32.mrb[0].mxu0
    %1146 = vdwg.mxu0
    %v1147 = vadd.f32 %v121, %v1142
    %v1148 = vxor.u32 %v1147, 2147483648
    %v1149 = vmul.f32 %v1148, 1.442695
    %v1150 = vpow.pop %v1149
    %v1151 = vadd.f32 %v1150, 1.0
    %v1152 = vrcp.pop %v1151
    %v1153 = vmul.f32 1.0, %v1152
    %v1154 = vtanh.pop %v1147
    %v1155 = vmul.f32 %v1153, %v1011
    %1157 = vrot.lane.b32.xlu0 %v1154, 64
    %v1158 = vpop.permute.xlu0 %1157
    %v1160 = vmul.f32 %v1153, %v1158
    %1162 = vrot.lane.b32.xlu0 %v1160, 32
    %v1163 = vpop.permute.xlu0 %1162
    %v1165 = vadd.f32 %v1155, %v1163
    %v1166 = vtanh.pop %v1165
    %1168 = vrot.lane.b32.xlu0 %v1166, 64
    %v1169 = vpop.permute.xlu0 %1168
    %v1171 = vmul.f32 %v1153, %v1169
    %1173 = vrot.lane.b32.xlu0 %v1171, 32
    %v1174 = vpop.permute.xlu0 %1173
    %1176 = vrot.lane.b32.xlu0 %v1093, 64
    %v1177 = vpop.permute.xlu0 %1176
    %v1179 = vsel %vm158, %v1174, %v1177
    %v1180 = vpack.c.bf16 %v1179, %v1179
    %v1182 = vsel %vm257, %v1180, 0
    %1184 = vmatprep.subr.bf16.mxu0 0
    %1185 = vmatpush1.bf16.msra.mxu0 %v249
    %1186 = vmatprep.subr.bf16.mxu0 0
    %1187 = vmatpush1.bf16.msra.mxu0 %v250
    %1188 = vmatprep.subr.bf16.mxu0 0
    %1189 = vmatpush1.bf16.msra.mxu0 %v251
    %1190 = vmatprep.subr.bf16.mxu0 0
    %1191 = vmatpush1.bf16.msra.mxu0 %v252
    %1192 = vmatprep.subr.bf16.mxu0 0
    %1193 = vmatpush1.bf16.msra.mxu0 0
    %1194 = vmatprep.subr.bf16.mxu0 0
    %1195 = vmatpush1.bf16.msra.mxu0 0
    %1196 = vmatprep.subr.bf16.mxu0 0
    %1197 = vmatpush1.bf16.msra.mxu0 0
    %1198 = vmatprep.subr.bf16.mxu0 0
    %1199 = vmatpush1.bf16.msra.mxu0 0
    %1200 = vmatprep.subr.bf16.mxu0 0
    %1201 = vmatpush1.bf16.msra.mxu0 0
    %1202 = vmatprep.subr.bf16.mxu0 0
    %1203 = vmatpush1.bf16.msra.mxu0 0
    %1204 = vmatprep.subr.bf16.mxu0 0
    %1205 = vmatpush1.bf16.msra.mxu0 0
    %1206 = vmatprep.subr.bf16.mxu0 0
    %1207 = vmatpush1.bf16.msra.mxu0 0
    %1208 = vmatprep.subr.bf16.mxu0 0
    %1209 = vmatpush1.bf16.msra.mxu0 0
    %1210 = vmatprep.subr.bf16.mxu0 0
    %1211 = vmatpush1.bf16.msra.mxu0 0
    %1212 = vmatprep.subr.bf16.mxu0 0
    %1213 = vmatpush1.bf16.msra.mxu0 0
    %1214 = vmatprep.subr.bf16.mxu0 0
    %1215 = vmatpush1.bf16.msra.mxu0 0
    %1216 = vmatprep.mubr.bf16.mxu0 0
    %1217 = vmatmul.mubr.bf16.gmra.mrb[0].mxu0 %v1182
    %v1218 = vpop.f32.mrb[0].mxu0
    %v1219 = vadd.f32 %v144, %v1218
    %v1220 = vpop.f32.mrb[0].mxu0
    %v1221 = vpop.f32.mrb[0].mxu0
    %v1222 = vpop.f32.mrb[0].mxu0
    %1223 = vdwg.mxu0
    %v1224 = vxor.u32 %v1219, 2147483648
    %v1225 = vmul.f32 %v1224, 1.442695
    %v1226 = vpow.pop %v1225
    %v1227 = vadd.f32 %v1226, 1.0
    %v1228 = vrcp.pop %v1227
    %v1229 = vmul.f32 1.0, %v1228
    %v1230 = vtanh.pop %v1219
    %v1231 = vmul.f32 %v1229, %v1087
    %1233 = vrot.lane.b32.xlu0 %v1230, 64
    %v1234 = vpop.permute.xlu0 %1233
    %v1236 = vmul.f32 %v1229, %v1234
    %1238 = vrot.lane.b32.xlu0 %v1236, 32
    %v1239 = vpop.permute.xlu0 %1238
    %v1241 = vadd.f32 %v1231, %v1239
    %v1242 = vtanh.pop %v1241
    %1244 = vrot.lane.b32.xlu0 %v1242, 64
    %v1245 = vpop.permute.xlu0 %1244
    %v1247 = vmul.f32 %v1229, %v1245
    %1249 = vrot.lane.b32.xlu0 %v1247, 32
    %v1250 = vpop.permute.xlu0 %1249
    %s1252 = scalar_lea.vmem [#allocation2], 48
    %1253 = vst.msk [vmem:[%s1252] sm:$0xff] %vm158, %v1250
    %v1254 = vpack.c.bf16 %v1171, %v1171
    %1256 = vrot.lane.b32.xlu0 %v1254, 32
    %v1257 = vpop.permute.xlu0 %1256
    %v1259 = vsel %vm158, %v1257, 0
    %1261 = vmatprep.subr.bf16.mxu0 0
    %1262 = vmatpush1.bf16.msra.mxu0 %v154
    %1263 = vmatprep.subr.bf16.mxu0 0
    %1264 = vmatpush1.bf16.msra.mxu0 %v155
    %1265 = vmatprep.subr.bf16.mxu0 0
    %1266 = vmatpush1.bf16.msra.mxu0 0
    %1267 = vmatprep.subr.bf16.mxu0 0
    %1268 = vmatpush1.bf16.msra.mxu0 0
    %1269 = vmatprep.subr.bf16.mxu0 0
    %1270 = vmatpush1.bf16.msra.mxu0 0
    %1271 = vmatprep.subr.bf16.mxu0 0
    %1272 = vmatpush1.bf16.msra.mxu0 0
    %1273 = vmatprep.subr.bf16.mxu0 0
    %1274 = vmatpush1.bf16.msra.mxu0 0
    %1275 = vmatprep.subr.bf16.mxu0 0
    %1276 = vmatpush1.bf16.msra.mxu0 0
    %1277 = vmatprep.subr.bf16.mxu0 0
    %1278 = vmatpush1.bf16.msra.mxu0 0
    %1279 = vmatprep.subr.bf16.mxu0 0
    %1280 = vmatpush1.bf16.msra.mxu0 0
    %1281 = vmatprep.subr.bf16.mxu0 0
    %1282 = vmatpush1.bf16.msra.mxu0 0
    %1283 = vmatprep.subr.bf16.mxu0 0
    %1284 = vmatpush1.bf16.msra.mxu0 0
    %1285 = vmatprep.subr.bf16.mxu0 0
    %1286 = vmatpush1.bf16.msra.mxu0 0
    %1287 = vmatprep.subr.bf16.mxu0 0
    %1288 = vmatpush1.bf16.msra.mxu0 0
    %1289 = vmatprep.subr.bf16.mxu0 0
    %1290 = vmatpush1.bf16.msra.mxu0 0
    %1291 = vmatprep.subr.bf16.mxu0 0
    %1292 = vmatpush1.bf16.msra.mxu0 0
    %1293 = vmatprep.mubr.bf16.mxu0 0
    %1294 = vmatmul.mubr.bf16.gmra.mrb[0].mxu0 %v1259
    %v1295 = vpop.f32.mrb[0].mxu0
    %v1296 = vadd.f32 0.0, %v1295
    %v1297 = vpop.f32.mrb[0].mxu0
    %v1298 = vpop.f32.mrb[0].mxu0
    %v1299 = vpop.f32.mrb[0].mxu0
    %1300 = vdwg.mxu0
    %v1301 = vadd.f32 %v124, %v1296
    %v1302 = vxor.u32 %v1301, 2147483648
    %v1303 = vmul.f32 %v1302, 1.442695
    %v1304 = vpow.pop %v1303
    %v1305 = vadd.f32 %v1304, 1.0
    %v1306 = vrcp.pop %v1305
    %v1307 = vmul.f32 1.0, %v1306
    %v1308 = vtanh.pop %v1301
    %v1309 = vmul.f32 %v1307, %v1165
    %1311 = vrot.lane.b32.xlu0 %v1308, 64
    %v1312 = vpop.permute.xlu0 %1311
    %v1314 = vmul.f32 %v1307, %v1312
    %1316 = vrot.lane.b32.xlu0 %v1314, 32
    %v1317 = vpop.permute.xlu0 %1316
    %v1319 = vadd.f32 %v1309, %v1317
    %v1320 = vtanh.pop %v1319
    %1322 = vrot.lane.b32.xlu0 %v1320, 64
    %v1323 = vpop.permute.xlu0 %1322
    %v1325 = vmul.f32 %v1307, %v1323
    %1327 = vrot.lane.b32.xlu0 %v1325, 32
    %v1328 = vpop.permute.xlu0 %1327
    %1330 = vrot.lane.b32.xlu0 %v1247, 64
    %v1331 = vpop.permute.xlu0 %1330
    %v1333 = vsel %vm158, %v1328, %v1331
    %v1334 = vpack.c.bf16 %v1333, %v1333
    %v1336 = vsel %vm257, %v1334, 0
    %1338 = vmatprep.subr.bf16.mxu0 0
    %1339 = vmatpush1.bf16.msra.mxu0 %v249
    %1340 = vmatprep.subr.bf16.mxu0 0
    %1341 = vmatpush1.bf16.msra.mxu0 %v250
    %1342 = vmatprep.subr.bf16.mxu0 0
    %1343 = vmatpush1.bf16.msra.mxu0 %v251
    %1344 = vmatprep.subr.bf16.mxu0 0
    %1345 = vmatpush1.bf16.msra.mxu0 %v252
    %1346 = vmatprep.subr.bf16.mxu0 0
    %1347 = vmatpush1.bf16.msra.mxu0 0
    %1348 = vmatprep.subr.bf16.mxu0 0
    %1349 = vmatpush1.bf16.msra.mxu0 0
    %1350 = vmatprep.subr.bf16.mxu0 0
    %1351 = vmatpush1.bf16.msra.mxu0 0
    %1352 = vmatprep.subr.bf16.mxu0 0
    %1353 = vmatpush1.bf16.msra.mxu0 0
    %1354 = vmatprep.subr.bf16.mxu0 0
    %1355 = vmatpush1.bf16.msra.mxu0 0
    %1356 = vmatprep.subr.bf16.mxu0 0
    %1357 = vmatpush1.bf16.msra.mxu0 0
    %1358 = vmatprep.subr.bf16.mxu0 0
    %1359 = vmatpush1.bf16.msra.mxu0 0
    %1360 = vmatprep.subr.bf16.mxu0 0
    %1361 = vmatpush1.bf16.msra.mxu0 0
    %1362 = vmatprep.subr.bf16.mxu0 0
    %1363 = vmatpush1.bf16.msra.mxu0 0
    %1364 = vmatprep.subr.bf16.mxu0 0
    %1365 = vmatpush1.bf16.msra.mxu0 0
    %1366 = vmatprep.subr.bf16.mxu0 0
    %1367 = vmatpush1.bf16.msra.mxu0 0
    %1368 = vmatprep.subr.bf16.mxu0 0
    %1369 = vmatpush1.bf16.msra.mxu0 0
    %1370 = vmatprep.mubr.bf16.mxu0 0
    %1371 = vmatmul.mubr.bf16.gmra.mrb[0].mxu0 %v1336
    %v1372 = vpop.f32.mrb[0].mxu0
    %v1373 = vadd.f32 %v144, %v1372
    %v1374 = vpop.f32.mrb[0].mxu0
    %v1375 = vpop.f32.mrb[0].mxu0
    %v1376 = vpop.f32.mrb[0].mxu0
    %1377 = vdwg.mxu0
    %v1378 = vxor.u32 %v1373, 2147483648
    %v1379 = vmul.f32 %v1378, 1.442695
    %v1380 = vpow.pop %v1379
    %v1381 = vadd.f32 %v1380, 1.0
    %v1382 = vrcp.pop %v1381
    %v1383 = vmul.f32 1.0, %v1382
    %v1384 = vtanh.pop %v1373
    %v1385 = vmul.f32 %v1383, %v1241
    %1387 = vrot.lane.b32.xlu0 %v1384, 64
    %v1388 = vpop.permute.xlu0 %1387
    %v1390 = vmul.f32 %v1383, %v1388
    %1392 = vrot.lane.b32.xlu0 %v1390, 32
    %v1393 = vpop.permute.xlu0 %1392
    %v1395 = vadd.f32 %v1385, %v1393
    %v1396 = vtanh.pop %v1395
    %1398 = vrot.lane.b32.xlu0 %v1396, 64
    %v1399 = vpop.permute.xlu0 %1398
    %v1401 = vmul.f32 %v1383, %v1399
    %1403 = vrot.lane.b32.xlu0 %v1401, 32
    %v1404 = vpop.permute.xlu0 %1403
    %s1406 = scalar_lea.vmem [#allocation2], 56
    %1407 = vst.msk [vmem:[%s1406] sm:$0xff] %vm158, %v1404
    // Predicated region
    $region26: #{tpu_custom_call.1} parent=1 // pred_check
      _
    $region27: #{tpu_custom_call.1} parent=1 // pred_check_branch
      %1409 = sbr.rel (0) target = $region29
    $region28: #{tpu_custom_call.1} parent=1 // pred_region
      %s1411 = ssub.s32 1024, 1024
      %1412 = vsyncadd [#allocation3], %s1411
      %s1413 = sshll.u32 [#allocation2], 4
      %s1414 = int_to_ptr.vmem [resolvable:$true] %s1413
      %1419 = dma.vmem_to_hbm [thread:$0]  %s1414, 1024, %s6, [#allocation3], 128, 128, 8
    $region29: #{tpu_custom_call.1} parent=1 // pred_fallthru
      _
    // Predicated region
    $region30: #{tpu_custom_call.1} parent=1 // pred_check
      _
    $region31: #{tpu_custom_call.1} parent=1 // pred_check_branch
      %1421 = sbr.rel (0) target = $region33
    $region32: #{tpu_custom_call.1} parent=1 // pred_region
      %1422 = dma.done [#allocation3], 1024
    $region33: #{tpu_custom_call.1} parent=1 // pred_fallthru
      _
    %1423 = vsyncpa [#allocation3], 1

</llo_original>
